<compile_context>
chip_gen: v7x
topology: tpu7x:2x2x1
jax: 0.10.0
libtpu: 0.0.40
codegen_flags: <defaults>
</compile_context>

<pallas_src>
import jax
import jax.numpy as jnp
from jax.experimental import pallas as pl
from jax.experimental.pallas import tpu as pltpu


def _tmodel_kernel(x_ref, w_ref, b_ref, out_ref):
    # x_ref: (TB, 2916), w_ref: (2916, 128), b_ref: (1, 128), out_ref: (TB, 128)
    out_ref[...] = (
        jnp.dot(x_ref[...], w_ref[...], preferred_element_type=jnp.float32)
        + b_ref[...]
    )


def _matmul_rows(x2d, w_pad, b_pad, n_rows, tb):
    """Compute rows [0, n_rows) of x2d @ w_pad + b_pad.  x2d may have >= n_rows rows;
    only in-bounds blocks are ever requested (n_rows % tb == 0)."""
    K_DIM = x2d.shape[1]
    N_PAD = w_pad.shape[1]
    return pl.pallas_call(
        _tmodel_kernel,
        out_shape=jax.ShapeDtypeStruct((n_rows, N_PAD), jnp.float32),
        grid=(n_rows // tb,),
        in_specs=[
            pl.BlockSpec((tb, K_DIM), lambda i: (i, 0)),      # activation rows (batch-tiled)
            pl.BlockSpec((K_DIM, N_PAD), lambda i: (0, 0)),   # folded weight (resident)
            pl.BlockSpec((1, N_PAD), lambda i: (0, 0)),       # folded bias (resident)
        ],
        out_specs=pl.BlockSpec((tb, N_PAD), lambda i: (i, 0)),
        compiler_params=pltpu.CompilerParams(
            dimension_semantics=("parallel",),
            vmem_limit_bytes=48 * 1024 * 1024,   # fits v7x's 64 MiB VMEM with headroom
        ),
    )(x2d, w_pad, b_pad)


def _pick_tb(batch, tb_max=512):
    """Batch-tile size: full-dim block for tiny batches; otherwise a multiple of 8 that
    gives >= 2 grid steps (v7x: both TensorCores) and, when possible, divides B exactly
    (no ragged tail, no padding copy)."""
    if batch < 16:
        return batch                              # full-dim block (sublane-rule exception)
    hi = min(tb_max, (batch // 2) // 8 * 8)       # >= 2 grid steps
    for tb in range(hi, 7, -8):                   # prefer an exact divisor of B
        if batch % tb == 0:
            return tb
    return hi                                     # ragged tail handled by a 2nd small call


def tmodel_forward(x, conv_w, conv_b, fc_w, fc_b, *, input_dtype=jnp.float32):
    """Forward pass of TModel.  x: (B, 1, 54, 54) -> (B, 10).  Accumulation is f32."""
    f32 = jnp.float32
    B, C_in, H, W = x.shape
    K = 3                                # kernel == stride == 3
    Ho, Wo = (H - K) // K + 1, (W - K) // K + 1
    P = Ho * Wo                          # 324
    KK = C_in * K * K                    # 9
    K_DIM = C_in * H * W                 # 2916 == P * KK (non-overlapping patches)
    C_out = conv_w.shape[0]
    N_OUT = fc_w.shape[0]                # 10
    N_PAD = 128                          # lane-dense output tile

    # ---- fold conv into the FC (f32, constants only, tiny) ----
    wc = conv_w.reshape(C_out, KK).astype(f32)                 # (C_out, C_in*9)
    wf = fc_w.reshape(N_OUT, C_out, P).astype(f32)             # (O, C_out, P) channel-major
    w_eff = jnp.einsum('ck,ocp->pko', wc, wf,
                       precision=jax.lax.Precision.HIGHEST).reshape(P * KK, N_OUT)
    b_eff = fc_b.astype(f32) + jnp.einsum('c,ocp->o', conv_b.astype(f32), wf,
                                          precision=jax.lax.Precision.HIGHEST)

    # ---- row-permute the folded weight into raw NCHW raster order, so the activation ----
    # ---- can be fed as x.reshape(B, C*H*W) with NO transpose / im2col / extra HBM pass ----
    cc, hh, ww = jnp.meshgrid(jnp.arange(C_in), jnp.arange(H), jnp.arange(W), indexing='ij')
    src = (((hh // K) * Wo + (ww // K)) * KK
           + cc * (K * K) + (hh % K) * K + (ww % K))
    w_raster = w_eff[src.reshape(-1)]                          # (K_DIM, N_OUT)

    # Pad output dim to 128 for unmasked, lane-dense stores.
    w_pad = jnp.zeros((K_DIM, N_PAD), f32).at[:, :N_OUT].set(w_raster).astype(input_dtype)
    b_pad = jnp.zeros((1, N_PAD), f32).at[:, :N_OUT].set(b_eff)

    # ---- activation: free metadata reshape (no transpose, no pad, no copy) ----
    x_flat = x.reshape(B, K_DIM).astype(input_dtype)

    # ---- batch tiling (no full-array padding; tiny tail call if B % TB != 0) ----
    TB = _pick_tb(B)
    main = (B // TB) * TB
    outs = []
    if main > 0:
        outs.append(_matmul_rows(x_flat, w_pad, b_pad, main, TB))
    if main < B:
        tail = B - main                                        # < TB rows: negligible copy
        outs.append(_matmul_rows(x_flat[main:], w_pad, b_pad, tail, tail))
    out = outs[0] if len(outs) == 1 else jnp.concatenate(outs, axis=0)
    return out[:, :N_OUT]


if __name__ == "__main__":
    key = jax.random.PRNGKey(0)
    kx, k1, k2, k3, k4 = jax.random.split(key, 5)

    B = 2
    # Input must be (B, 1, 54, 54) so the conv output 3*18*18 = 972 matches Linear(972, 10).
    x = jax.random.normal(kx, (B, 1, 54, 54), dtype=jnp.float32)

    # Deterministic parameter init (PyTorch-default-like uniform bounds).
    bnd_c = 1.0 / (1 * 3 * 3) ** 0.5
    conv_w = jax.random.uniform(k1, (3, 1, 3, 3), jnp.float32, -bnd_c, bnd_c)
    conv_b = jax.random.uniform(k2, (3,), jnp.float32, -bnd_c, bnd_c)
    bnd_f = 1.0 / 972 ** 0.5
    fc_w = jax.random.uniform(k3, (10, 972), jnp.float32, -bnd_f, bnd_f)
    fc_b = jax.random.uniform(k4, (10,), jnp.float32, -bnd_f, bnd_f)

    out = jax.block_until_ready(tmodel_forward(x, conv_w, conv_b, fc_w, fc_b))

    # Pure-JAX reference with PyTorch semantics (full precision).
    ref_y = jax.lax.conv_general_dilated(
        x, conv_w, window_strides=(3, 3), padding="VALID",
        dimension_numbers=("NCHW", "OIHW", "NCHW"),
        precision=jax.lax.Precision.HIGHEST) + conv_b.reshape(1, 3, 1, 1)
    ref = jnp.matmul(ref_y.reshape(B, -1), fc_w.T,
                     precision=jax.lax.Precision.HIGHEST) + fc_b

    assert out.shape == (B, 10), out.shape
    assert jnp.allclose(out, ref, rtol=1e-3, atol=1e-3), float(jnp.max(jnp.abs(out - ref)))
    print("KERNEL_OK")
</pallas_src>

<mosaic_0001>
module attributes {stable_mosaic.version = 11 : i64} {
  func.func @_tmodel_kernel(%arg0: i32, %arg1: memref<2x2916xf32, #tpu.memory_space<vmem>>, %arg2: memref<2916x128xf32, #tpu.memory_space<vmem>>, %arg3: memref<1x128xf32, #tpu.memory_space<vmem>>, %arg4: memref<2x128xf32, #tpu.memory_space<vmem>>) attributes {dimension_semantics = [#tpu.dimension_semantics<parallel>], iteration_bounds = array<i64: 1>, scalar_prefetch = 0 : i64, scratch_operands = 0 : i64, tpu.core_type = #tpu.core_type<tc>, window_params = [{transform_indices = @transform_0, window_bounds = array<i64: 2, 2916>}, {pipeline_mode = #tpu.pipeline_mode<synchronous>, transform_indices = @transform_1, window_bounds = array<i64: 2916, 128>}, {pipeline_mode = #tpu.pipeline_mode<synchronous>, transform_indices = @transform_2, window_bounds = array<i64: 1, 128>}, {transform_indices = @transform_3, window_bounds = array<i64: 2, 128>}]} {
    %c0 = arith.constant 0 : index
    %c0_0 = arith.constant 0 : index
    %0 = vector.load %arg1[%c0, %c0_0] : memref<2x2916xf32, #tpu.memory_space<vmem>>, vector<2x2916xf32>
    %c0_1 = arith.constant 0 : index
    %c0_2 = arith.constant 0 : index
    %1 = vector.load %arg2[%c0_1, %c0_2] : memref<2916x128xf32, #tpu.memory_space<vmem>>, vector<2916x128xf32>
    %cst = arith.constant dense<0.000000e+00> : vector<2x128xf32>
    %2 = tpu.matmul %0, %1, %cst {dimension_numbers = #tpu.dot_dimension_numbers<[1], [0], [0], [1], [0, 0, 1, 1], [], []>} : vector<2x2916xf32>, vector<2916x128xf32>, vector<2x128xf32> -> vector<2x128xf32>
    %c0_3 = arith.constant 0 : index
    %c0_4 = arith.constant 0 : index
    %3 = vector.load %arg3[%c0_3, %c0_4] : memref<1x128xf32, #tpu.memory_space<vmem>>, vector<1x128xf32>
    %4 = vector.broadcast %3 : vector<1x128xf32> to vector<2x128xf32>
    %5 = arith.addf %2, %4 : vector<2x128xf32>
    %c0_5 = arith.constant 0 : index
    %c0_6 = arith.constant 0 : index
    %6 = vector.load %arg4[%c0_5, %c0_6] : memref<2x128xf32, #tpu.memory_space<vmem>>, vector<2x128xf32>
    tpu.vector_store %arg4[%c0_5, %c0_6], %5 {strides = array<i32>} : memref<2x128xf32, #tpu.memory_space<vmem>>, vector<2x128xf32>,
    return
  }
  func.func @transform_0(%arg0: i32) -> (i32, i32) {
    %c0_i32 = arith.constant 0 : i32
    %c0_i32_0 = arith.constant 0 : i32
    return %arg0, %c0_i32 : i32, i32
  }
  func.func @transform_1(%arg0: i32) -> (i32, i32) {
    %c0_i32 = arith.constant 0 : i32
    %c0_i32_0 = arith.constant 0 : i32
    %c0_i32_1 = arith.constant 0 : i32
    return %c0_i32, %c0_i32_0 : i32, i32
  }
  func.func @transform_2(%arg0: i32) -> (i32, i32) {
    %c0_i32 = arith.constant 0 : i32
    %c0_i32_0 = arith.constant 0 : i32
    %c0_i32_1 = arith.constant 0 : i32
    return %c0_i32, %c0_i32_0 : i32, i32
  }
  func.func @transform_3(%arg0: i32) -> (i32, i32) {
    %c0_i32 = arith.constant 0 : i32
    %c0_i32_0 = arith.constant 0 : i32
    return %arg0, %c0_i32 : i32, i32
  }
}

</mosaic_0001>

<llo_original>
// kernel: tpu_custom_call.1
$region0: #{tpu_custom_call.1}
  #allocation0 [shape = 'u32[]', space=smem, size = 0x4, offset = 0x4, fixed_abs, tag = 'smem constant byte address 0x4 - core index']
  #allocation1 [shape = 'u32[144,128]{1,0:T(1,128)}', space=vmem, size = 0x12000, scoped, tag = 'internal scratch']
  %s0 = inlined_call_operand.hbm [shape: f32[2,2916], index: 0, kind: input, shape index: {}]
  %s1 = inlined_call_operand.hbm [shape: f32[2916,128], index: 1, kind: input, shape index: {}]
  %s2 = inlined_call_operand.hbm [shape: f32[1,128], index: 2, kind: input, shape index: {}]
  %s3 = inlined_call_operand.hbm [shape: f32[2,128], index: 3, kind: output, shape index: {}]
  %s4 = sld [smem:[#allocation0]]
  $region34: #{tpu_custom_call.1} parent=0
    _
  %s6 = ssub.s32 1, %s4
  %s7 = scalar_select 0, %s6, %s4
  $region1: #{tpu_custom_call.1} parent=0
    #allocation2 [shape = 'u8[23552]{0}', space=vmem, size = 0x5c00, scoped, tag = 'input window, operand 0, single buffered']
    #allocation3 [shape = 's32[1]{0}', space=sflag, size = 0x4, scoped, tag = 'scoped memory for tpu_custom_call.1']
    #allocation4 [shape = 's32[1]{0}', space=sflag, size = 0x4, scoped, tag = 'scoped memory for tpu_custom_call.1']
    #allocation5 [shape = 'u8[1495040]{0}', space=vmem, size = 0x16d000, scoped, tag = 'input window, operand 1, single buffered']
    #allocation6 [shape = 's32[1]{0}', space=sflag, size = 0x4, scoped, tag = 'scoped memory for tpu_custom_call.1']
    #allocation7 [shape = 'u8[512]{0}', space=vmem, size = 0x400, scoped, tag = 'input window, operand 2, single buffered']
    #allocation8 [shape = 'u8[1024]{0}', space=vmem, size = 0x400, scoped, tag = 'output window, operand 0, single buffered']
    %8 = vsyncpa [#allocation3], 0
    %9 = vsyncpa [#allocation6], 0
    %10 = vsyncpa [#allocation4], 0
    // Predicated region
    $region2: #{tpu_custom_call.1} parent=1 // pred_check
      _
    $region3: #{tpu_custom_call.1} parent=1 // pred_check_branch
      %12 = sbr.rel (0) target = $region5
    $region4: #{tpu_custom_call.1} parent=1 // pred_region
      %s14 = ssub.s32 736, 736
      %15 = vsyncadd [#allocation3], %s14
      %s17 = sshll.u32 [#allocation2], 4
      %s18 = int_to_ptr.vmem [resolvable:$true] %s17
      %20 = dma.hbm_to_vmem [thread:$0]  %s0, 736, %s18, [#allocation3]
    $region5: #{tpu_custom_call.1} parent=1 // pred_fallthru
      _
    // Predicated region
    $region6: #{tpu_custom_call.1} parent=1 // pred_check
      _
    $region7: #{tpu_custom_call.1} parent=1 // pred_check_branch
      %22 = sbr.rel (0) target = $region9
    $region8: #{tpu_custom_call.1} parent=1 // pred_region
      %s24 = ssub.s32 46720, 46720
      %25 = vsyncadd [#allocation6], %s24
      %s26 = sshll.u32 [#allocation5], 4
      %s27 = int_to_ptr.vmem [resolvable:$true] %s26
      %32 = dma.hbm_to_vmem [thread:$0]  %s1, 46720, %s27, [#allocation6], 128, 128, 8
    $region9: #{tpu_custom_call.1} parent=1 // pred_fallthru
      _
    // Predicated region
    $region10: #{tpu_custom_call.1} parent=1 // pred_check
      _
    $region11: #{tpu_custom_call.1} parent=1 // pred_check_branch
      %34 = sbr.rel (0) target = $region13
    $region12: #{tpu_custom_call.1} parent=1 // pred_region
      %s36 = ssub.s32 16, 16
      %37 = vsyncadd [#allocation6], %s36
      %s39 = sshll.u32 [#allocation7], 4
      %s40 = int_to_ptr.vmem [resolvable:$true] %s39
      %42 = dma.hbm_to_vmem [thread:$0]  %s2, 16, %s40, [#allocation6]
    $region13: #{tpu_custom_call.1} parent=1 // pred_fallthru
      _
    // Predicated region
    $region14: #{tpu_custom_call.1} parent=1 // pred_check
      _
    $region15: #{tpu_custom_call.1} parent=1 // pred_check_branch
      %44 = sbr.rel (0) target = $region17
    $region16: #{tpu_custom_call.1} parent=1 // pred_region
      %45 = dma.done [#allocation3], 736
    $region17: #{tpu_custom_call.1} parent=1 // pred_fallthru
      _
    // Predicated region
    $region18: #{tpu_custom_call.1} parent=1 // pred_check
      _
    $region19: #{tpu_custom_call.1} parent=1 // pred_check_branch
      %47 = sbr.rel (0) target = $region21
    $region20: #{tpu_custom_call.1} parent=1 // pred_region
      %48 = dma.done [#allocation6], 46720
    $region21: #{tpu_custom_call.1} parent=1 // pred_fallthru
      _
    // Predicated region
    $region22: #{tpu_custom_call.1} parent=1 // pred_check
      _
    $region23: #{tpu_custom_call.1} parent=1 // pred_check_branch
      %50 = sbr.rel (0) target = $region25
    $region24: #{tpu_custom_call.1} parent=1 // pred_region
      %51 = dma.done [#allocation6], 16
    $region25: #{tpu_custom_call.1} parent=1 // pred_fallthru
      _
    %v52 = vld [vmem:[#allocation2] sm:$0xff]
    %v53 = vld [vmem:[#allocation2 + $0x8] sm:$0xff]
    %v54 = vld [vmem:[#allocation2 + $0x10] sm:$0xff]
    %v55 = vld [vmem:[#allocation2 + $0x18] sm:$0xff]
    %v56 = vld [vmem:[#allocation2 + $0x20] sm:$0xff]
    %v57 = vld [vmem:[#allocation2 + $0x28] sm:$0x3f]
    %v58 = vld [vmem:[#allocation5] sm:$0xff]
    %v59 = vld [vmem:[#allocation5 + $0x8] sm:$0xff]
    %v60 = vld [vmem:[#allocation5 + $0x10] sm:$0xff]
    %v61 = vld [vmem:[#allocation5 + $0x18] sm:$0xff]
    %v62 = vld [vmem:[#allocation5 + $0x20] sm:$0xff]
    %v63 = vld [vmem:[#allocation5 + $0x28] sm:$0xff]
    %v64 = vld [vmem:[#allocation5 + $0x30] sm:$0xff]
    %v65 = vld [vmem:[#allocation5 + $0x38] sm:$0xff]
    %v66 = vld [vmem:[#allocation5 + $0x40] sm:$0xff]
    %v67 = vld [vmem:[#allocation5 + $0x48] sm:$0xff]
    %v68 = vld [vmem:[#allocation5 + $0x50] sm:$0xff]
    %v69 = vld [vmem:[#allocation5 + $0x58] sm:$0xff]
    %v70 = vld [vmem:[#allocation5 + $0x60] sm:$0xff]
    %v71 = vld [vmem:[#allocation5 + $0x68] sm:$0xff]
    %v72 = vld [vmem:[#allocation5 + $0x70] sm:$0xff]
    %v73 = vld [vmem:[#allocation5 + $0x78] sm:$0xff]
    %v74 = vld [vmem:[#allocation5 + $0x80] sm:$0xff]
    %v75 = vld [vmem:[#allocation5 + $0x88] sm:$0xff]
    %v76 = vld [vmem:[#allocation5 + $0x90] sm:$0xff]
    %v77 = vld [vmem:[#allocation5 + $0x98] sm:$0xff]
    %v78 = vld [vmem:[#allocation5 + $0xa0] sm:$0xff]
    %v79 = vld [vmem:[#allocation5 + $0xa8] sm:$0xff]
    %v80 = vld [vmem:[#allocation5 + $0xb0] sm:$0xff]
    %v81 = vld [vmem:[#allocation5 + $0xb8] sm:$0xff]
    %v82 = vld [vmem:[#allocation5 + $0xc0] sm:$0xff]
    %v83 = vld [vmem:[#allocation5 + $0xc8] sm:$0xff]
    %v84 = vld [vmem:[#allocation5 + $0xd0] sm:$0xff]
    %v85 = vld [vmem:[#allocation5 + $0xd8] sm:$0xff]
    %v86 = vld [vmem:[#allocation5 + $0xe0] sm:$0xff]
    %v87 = vld [vmem:[#allocation5 + $0xe8] sm:$0xff]
    %v88 = vld [vmem:[#allocation5 + $0xf0] sm:$0xff]
    %v89 = vld [vmem:[#allocation5 + $0xf8] sm:$0xff]
    %v90 = vld [vmem:[#allocation5 + $0x100] sm:$0xff]
    %v91 = vld [vmem:[#allocation5 + $0x108] sm:$0xff]
    %v92 = vld [vmem:[#allocation5 + $0x110] sm:$0xff]
    %v93 = vld [vmem:[#allocation5 + $0x118] sm:$0xff]
    %v94 = vld [vmem:[#allocation5 + $0x120] sm:$0xff]
    %v95 = vld [vmem:[#allocation5 + $0x128] sm:$0xff]
    %v96 = vld [vmem:[#allocation5 + $0x130] sm:$0xff]
    %v97 = vld [vmem:[#allocation5 + $0x138] sm:$0xff]
    %v98 = vld [vmem:[#allocation5 + $0x140] sm:$0xff]
    %v99 = vld [vmem:[#allocation5 + $0x148] sm:$0xff]
    %v100 = vld [vmem:[#allocation5 + $0x150] sm:$0xff]
    %v101 = vld [vmem:[#allocation5 + $0x158] sm:$0xff]
    %v102 = vld [vmem:[#allocation5 + $0x160] sm:$0xff]
    %v103 = vld [vmem:[#allocation5 + $0x168] sm:$0xff]
    %v104 = vld [vmem:[#allocation5 + $0x170] sm:$0xff]
    %v105 = vld [vmem:[#allocation5 + $0x178] sm:$0xff]
    %v106 = vld [vmem:[#allocation5 + $0x180] sm:$0xff]
    %v107 = vld [vmem:[#allocation5 + $0x188] sm:$0xff]
    %v108 = vld [vmem:[#allocation5 + $0x190] sm:$0xff]
    %v109 = vld [vmem:[#allocation5 + $0x198] sm:$0xff]
    %v110 = vld [vmem:[#allocation5 + $0x1a0] sm:$0xff]
    %v111 = vld [vmem:[#allocation5 + $0x1a8] sm:$0xff]
    %v112 = vld [vmem:[#allocation5 + $0x1b0] sm:$0xff]
    %v113 = vld [vmem:[#allocation5 + $0x1b8] sm:$0xff]
    %v114 = vld [vmem:[#allocation5 + $0x1c0] sm:$0xff]
    %v115 = vld [vmem:[#allocation5 + $0x1c8] sm:$0xff]
    %v116 = vld [vmem:[#allocation5 + $0x1d0] sm:$0xff]
    %v117 = vld [vmem:[#allocation5 + $0x1d8] sm:$0xff]
    %v118 = vld [vmem:[#allocation5 + $0x1e0] sm:$0xff]
    %v119 = vld [vmem:[#allocation5 + $0x1e8] sm:$0xff]
    %v120 = vld [vmem:[#allocation5 + $0x1f0] sm:$0xff]
    %v121 = vld [vmem:[#allocation5 + $0x1f8] sm:$0xff]
    %v122 = vld [vmem:[#allocation5 + $0x200] sm:$0xff]
    %v123 = vld [vmem:[#allocation5 + $0x208] sm:$0xff]
    %v124 = vld [vmem:[#allocation5 + $0x210] sm:$0xff]
    %v125 = vld [vmem:[#allocation5 + $0x218] sm:$0xff]
    %v126 = vld [vmem:[#allocation5 + $0x220] sm:$0xff]
    %v127 = vld [vmem:[#allocation5 + $0x228] sm:$0xff]
    %v128 = vld [vmem:[#allocation5 + $0x230] sm:$0xff]
    %v129 = vld [vmem:[#allocation5 + $0x238] sm:$0xff]
    %v130 = vld [vmem:[#allocation5 + $0x240] sm:$0xff]
    %v131 = vld [vmem:[#allocation5 + $0x248] sm:$0xff]
    %v132 = vld [vmem:[#allocation5 + $0x250] sm:$0xff]
    %v133 = vld [vmem:[#allocation5 + $0x258] sm:$0xff]
    %v134 = vld [vmem:[#allocation5 + $0x260] sm:$0xff]
    %v135 = vld [vmem:[#allocation5 + $0x268] sm:$0xff]
    %v136 = vld [vmem:[#allocation5 + $0x270] sm:$0xff]
    %v137 = vld [vmem:[#allocation5 + $0x278] sm:$0xff]
    %v138 = vld [vmem:[#allocation5 + $0x280] sm:$0xff]
    %v139 = vld [vmem:[#allocation5 + $0x288] sm:$0xff]
    %v140 = vld [vmem:[#allocation5 + $0x290] sm:$0xff]
    %v141 = vld [vmem:[#allocation5 + $0x298] sm:$0xff]
    %v142 = vld [vmem:[#allocation5 + $0x2a0] sm:$0xff]
    %v143 = vld [vmem:[#allocation5 + $0x2a8] sm:$0xff]
    %v144 = vld [vmem:[#allocation5 + $0x2b0] sm:$0xff]
    %v145 = vld [vmem:[#allocation5 + $0x2b8] sm:$0xff]
    %v146 = vld [vmem:[#allocation5 + $0x2c0] sm:$0xff]
    %v147 = vld [vmem:[#allocation5 + $0x2c8] sm:$0xff]
    %v148 = vld [vmem:[#allocation5 + $0x2d0] sm:$0xff]
    %v149 = vld [vmem:[#allocation5 + $0x2d8] sm:$0xff]
    %v150 = vld [vmem:[#allocation5 + $0x2e0] sm:$0xff]
    %v151 = vld [vmem:[#allocation5 + $0x2e8] sm:$0xff]
    %v152 = vld [vmem:[#allocation5 + $0x2f0] sm:$0xff]
    %v153 = vld [vmem:[#allocation5 + $0x2f8] sm:$0xff]
    %v154 = vld [vmem:[#allocation5 + $0x300] sm:$0xff]
    %v155 = vld [vmem:[#allocation5 + $0x308] sm:$0xff]
    %v156 = vld [vmem:[#allocation5 + $0x310] sm:$0xff]
    %v157 = vld [vmem:[#allocation5 + $0x318] sm:$0xff]
    %v158 = vld [vmem:[#allocation5 + $0x320] sm:$0xff]
    %v159 = vld [vmem:[#allocation5 + $0x328] sm:$0xff]
    %v160 = vld [vmem:[#allocation5 + $0x330] sm:$0xff]
    %v161 = vld [vmem:[#allocation5 + $0x338] sm:$0xff]
    %v162 = vld [vmem:[#allocation5 + $0x340] sm:$0xff]
    %v163 = vld [vmem:[#allocation5 + $0x348] sm:$0xff]
    %v164 = vld [vmem:[#allocation5 + $0x350] sm:$0xff]
    %v165 = vld [vmem:[#allocation5 + $0x358] sm:$0xff]
    %v166 = vld [vmem:[#allocation5 + $0x360] sm:$0xff]
    %v167 = vld [vmem:[#allocation5 + $0x368] sm:$0xff]
    %v168 = vld [vmem:[#allocation5 + $0x370] sm:$0xff]
    %v169 = vld [vmem:[#allocation5 + $0x378] sm:$0xff]
    %v170 = vld [vmem:[#allocation5 + $0x380] sm:$0xff]
    %v171 = vld [vmem:[#allocation5 + $0x388] sm:$0xff]
    %v172 = vld [vmem:[#allocation5 + $0x390] sm:$0xff]
    %v173 = vld [vmem:[#allocation5 + $0x398] sm:$0xff]
    %v174 = vld [vmem:[#allocation5 + $0x3a0] sm:$0xff]
    %v175 = vld [vmem:[#allocation5 + $0x3a8] sm:$0xff]
    %v176 = vld [vmem:[#allocation5 + $0x3b0] sm:$0xff]
    %v177 = vld [vmem:[#allocation5 + $0x3b8] sm:$0xff]
    %v178 = vld [vmem:[#allocation5 + $0x3c0] sm:$0xff]
    %v179 = vld [vmem:[#allocation5 + $0x3c8] sm:$0xff]
    %v180 = vld [vmem:[#allocation5 + $0x3d0] sm:$0xff]
    %v181 = vld [vmem:[#allocation5 + $0x3d8] sm:$0xff]
    %v182 = vld [vmem:[#allocation5 + $0x3e0] sm:$0xff]
    %v183 = vld [vmem:[#allocation5 + $0x3e8] sm:$0xff]
    %v184 = vld [vmem:[#allocation5 + $0x3f0] sm:$0xff]
    %v185 = vld [vmem:[#allocation5 + $0x3f8] sm:$0xff]
    %v186 = vld [vmem:[#allocation5 + $0x400] sm:$0xff]
    %v187 = vld [vmem:[#allocation5 + $0x408] sm:$0xff]
    %v188 = vld [vmem:[#allocation5 + $0x410] sm:$0xff]
    %v189 = vld [vmem:[#allocation5 + $0x418] sm:$0xff]
    %v190 = vld [vmem:[#allocation5 + $0x420] sm:$0xff]
    %v191 = vld [vmem:[#allocation5 + $0x428] sm:$0xff]
    %v192 = vld [vmem:[#allocation5 + $0x430] sm:$0xff]
    %v193 = vld [vmem:[#allocation5 + $0x438] sm:$0xff]
    %v194 = vld [vmem:[#allocation5 + $0x440] sm:$0xff]
    %v195 = vld [vmem:[#allocation5 + $0x448] sm:$0xff]
    %v196 = vld [vmem:[#allocation5 + $0x450] sm:$0xff]
    %v197 = vld [vmem:[#allocation5 + $0x458] sm:$0xff]
    %v198 = vld [vmem:[#allocation5 + $0x460] sm:$0xff]
    %v199 = vld [vmem:[#allocation5 + $0x468] sm:$0xff]
    %v200 = vld [vmem:[#allocation5 + $0x470] sm:$0xff]
    %v201 = vld [vmem:[#allocation5 + $0x478] sm:$0xff]
    %v202 = vld [vmem:[#allocation5 + $0x480] sm:$0xff]
    %v203 = vld [vmem:[#allocation5 + $0x488] sm:$0xff]
    %v204 = vld [vmem:[#allocation5 + $0x490] sm:$0xff]
    %v205 = vld [vmem:[#allocation5 + $0x498] sm:$0xff]
    %v206 = vld [vmem:[#allocation5 + $0x4a0] sm:$0xff]
    %v207 = vld [vmem:[#allocation5 + $0x4a8] sm:$0xff]
    %v208 = vld [vmem:[#allocation5 + $0x4b0] sm:$0xff]
    %v209 = vld [vmem:[#allocation5 + $0x4b8] sm:$0xff]
    %v210 = vld [vmem:[#allocation5 + $0x4c0] sm:$0xff]
    %v211 = vld [vmem:[#allocation5 + $0x4c8] sm:$0xff]
    %v212 = vld [vmem:[#allocation5 + $0x4d0] sm:$0xff]
    %v213 = vld [vmem:[#allocation5 + $0x4d8] sm:$0xff]
    %v214 = vld [vmem:[#allocation5 + $0x4e0] sm:$0xff]
    %v215 = vld [vmem:[#allocation5 + $0x4e8] sm:$0xff]
    %v216 = vld [vmem:[#allocation5 + $0x4f0] sm:$0xff]
    %v217 = vld [vmem:[#allocation5 + $0x4f8] sm:$0xff]
    %v218 = vld [vmem:[#allocation5 + $0x500] sm:$0xff]
    %v219 = vld [vmem:[#allocation5 + $0x508] sm:$0xff]
    %v220 = vld [vmem:[#allocation5 + $0x510] sm:$0xff]
    %v221 = vld [vmem:[#allocation5 + $0x518] sm:$0xff]
    %v222 = vld [vmem:[#allocation5 + $0x520] sm:$0xff]
    %v223 = vld [vmem:[#allocation5 + $0x528] sm:$0xff]
    %v224 = vld [vmem:[#allocation5 + $0x530] sm:$0xff]
    %v225 = vld [vmem:[#allocation5 + $0x538] sm:$0xff]
    %v226 = vld [vmem:[#allocation5 + $0x540] sm:$0xff]
    %v227 = vld [vmem:[#allocation5 + $0x548] sm:$0xff]
    %v228 = vld [vmem:[#allocation5 + $0x550] sm:$0xff]
    %v229 = vld [vmem:[#allocation5 + $0x558] sm:$0xff]
    %v230 = vld [vmem:[#allocation5 + $0x560] sm:$0xff]
    %v231 = vld [vmem:[#allocation5 + $0x568] sm:$0xff]
    %v232 = vld [vmem:[#allocation5 + $0x570] sm:$0xff]
    %v233 = vld [vmem:[#allocation5 + $0x578] sm:$0xff]
    %v234 = vld [vmem:[#allocation5 + $0x580] sm:$0xff]
    %v235 = vld [vmem:[#allocation5 + $0x588] sm:$0xff]
    %v236 = vld [vmem:[#allocation5 + $0x590] sm:$0xff]
    %v237 = vld [vmem:[#allocation5 + $0x598] sm:$0xff]
    %v238 = vld [vmem:[#allocation5 + $0x5a0] sm:$0xff]
    %v239 = vld [vmem:[#allocation5 + $0x5a8] sm:$0xff]
    %v240 = vld [vmem:[#allocation5 + $0x5b0] sm:$0xff]
    %v241 = vld [vmem:[#allocation5 + $0x5b8] sm:$0xff]
    %v242 = vld [vmem:[#allocation5 + $0x5c0] sm:$0xff]
    %v243 = vld [vmem:[#allocation5 + $0x5c8] sm:$0xff]
    %v244 = vld [vmem:[#allocation5 + $0x5d0] sm:$0xff]
    %v245 = vld [vmem:[#allocation5 + $0x5d8] sm:$0xff]
    %v246 = vld [vmem:[#allocation5 + $0x5e0] sm:$0xff]
    %v247 = vld [vmem:[#allocation5 + $0x5e8] sm:$0xff]
    %v248 = vld [vmem:[#allocation5 + $0x5f0] sm:$0xff]
    %v249 = vld [vmem:[#allocation5 + $0x5f8] sm:$0xff]
    %v250 = vld [vmem:[#allocation5 + $0x600] sm:$0xff]
    %v251 = vld [vmem:[#allocation5 + $0x608] sm:$0xff]
    %v252 = vld [vmem:[#allocation5 + $0x610] sm:$0xff]
    %v253 = vld [vmem:[#allocation5 + $0x618] sm:$0xff]
    %v254 = vld [vmem:[#allocation5 + $0x620] sm:$0xff]
    %v255 = vld [vmem:[#allocation5 + $0x628] sm:$0xff]
    %v256 = vld [vmem:[#allocation5 + $0x630] sm:$0xff]
    %v257 = vld [vmem:[#allocation5 + $0x638] sm:$0xff]
    %v258 = vld [vmem:[#allocation5 + $0x640] sm:$0xff]
    %v259 = vld [vmem:[#allocation5 + $0x648] sm:$0xff]
    %v260 = vld [vmem:[#allocation5 + $0x650] sm:$0xff]
    %v261 = vld [vmem:[#allocation5 + $0x658] sm:$0xff]
    %v262 = vld [vmem:[#allocation5 + $0x660] sm:$0xff]
    %v263 = vld [vmem:[#allocation5 + $0x668] sm:$0xff]
    %v264 = vld [vmem:[#allocation5 + $0x670] sm:$0xff]
    %v265 = vld [vmem:[#allocation5 + $0x678] sm:$0xff]
    %v266 = vld [vmem:[#allocation5 + $0x680] sm:$0xff]
    %v267 = vld [vmem:[#allocation5 + $0x688] sm:$0xff]
    %v268 = vld [vmem:[#allocation5 + $0x690] sm:$0xff]
    %v269 = vld [vmem:[#allocation5 + $0x698] sm:$0xff]
    %v270 = vld [vmem:[#allocation5 + $0x6a0] sm:$0xff]
    %v271 = vld [vmem:[#allocation5 + $0x6a8] sm:$0xff]
    %v272 = vld [vmem:[#allocation5 + $0x6b0] sm:$0xff]
    %v273 = vld [vmem:[#allocation5 + $0x6b8] sm:$0xff]
    %v274 = vld [vmem:[#allocation5 + $0x6c0] sm:$0xff]
    %v275 = vld [vmem:[#allocation5 + $0x6c8] sm:$0xff]
    %v276 = vld [vmem:[#allocation5 + $0x6d0] sm:$0xff]
    %v277 = vld [vmem:[#allocation5 + $0x6d8] sm:$0xff]
    %v278 = vld [vmem:[#allocation5 + $0x6e0] sm:$0xff]
    %v279 = vld [vmem:[#allocation5 + $0x6e8] sm:$0xff]
    %v280 = vld [vmem:[#allocation5 + $0x6f0] sm:$0xff]
    %v281 = vld [vmem:[#allocation5 + $0x6f8] sm:$0xff]
    %v282 = vld [vmem:[#allocation5 + $0x700] sm:$0xff]
    %v283 = vld [vmem:[#allocation5 + $0x708] sm:$0xff]
    %v284 = vld [vmem:[#allocation5 + $0x710] sm:$0xff]
    %v285 = vld [vmem:[#allocation5 + $0x718] sm:$0xff]
    %v286 = vld [vmem:[#allocation5 + $0x720] sm:$0xff]
    %v287 = vld [vmem:[#allocation5 + $0x728] sm:$0xff]
    %v288 = vld [vmem:[#allocation5 + $0x730] sm:$0xff]
    %v289 = vld [vmem:[#allocation5 + $0x738] sm:$0xff]
    %v290 = vld [vmem:[#allocation5 + $0x740] sm:$0xff]
    %v291 = vld [vmem:[#allocation5 + $0x748] sm:$0xff]
    %v292 = vld [vmem:[#allocation5 + $0x750] sm:$0xff]
    %v293 = vld [vmem:[#allocation5 + $0x758] sm:$0xff]
    %v294 = vld [vmem:[#allocation5 + $0x760] sm:$0xff]
    %v295 = vld [vmem:[#allocation5 + $0x768] sm:$0xff]
    %v296 = vld [vmem:[#allocation5 + $0x770] sm:$0xff]
    %v297 = vld [vmem:[#allocation5 + $0x778] sm:$0xff]
    %v298 = vld [vmem:[#allocation5 + $0x780] sm:$0xff]
    %v299 = vld [vmem:[#allocation5 + $0x788] sm:$0xff]
    %v300 = vld [vmem:[#allocation5 + $0x790] sm:$0xff]
    %v301 = vld [vmem:[#allocation5 + $0x798] sm:$0xff]
    %v302 = vld [vmem:[#allocation5 + $0x7a0] sm:$0xff]
    %v303 = vld [vmem:[#allocation5 + $0x7a8] sm:$0xff]
    %v304 = vld [vmem:[#allocation5 + $0x7b0] sm:$0xff]
    %v305 = vld [vmem:[#allocation5 + $0x7b8] sm:$0xff]
    %v306 = vld [vmem:[#allocation5 + $0x7c0] sm:$0xff]
    %v307 = vld [vmem:[#allocation5 + $0x7c8] sm:$0xff]
    %v308 = vld [vmem:[#allocation5 + $0x7d0] sm:$0xff]
    %v309 = vld [vmem:[#allocation5 + $0x7d8] sm:$0xff]
    %v310 = vld [vmem:[#allocation5 + $0x7e0] sm:$0xff]
    %v311 = vld [vmem:[#allocation5 + $0x7e8] sm:$0xff]
    %v312 = vld [vmem:[#allocation5 + $0x7f0] sm:$0xff]
    %v313 = vld [vmem:[#allocation5 + $0x7f8] sm:$0xff]
    %v314 = vld [vmem:[#allocation5 + $0x800] sm:$0xff]
    %v315 = vld [vmem:[#allocation5 + $0x808] sm:$0xff]
    %v316 = vld [vmem:[#allocation5 + $0x810] sm:$0xff]
    %v317 = vld [vmem:[#allocation5 + $0x818] sm:$0xff]
    %v318 = vld [vmem:[#allocation5 + $0x820] sm:$0xff]
    %v319 = vld [vmem:[#allocation5 + $0x828] sm:$0xff]
    %v320 = vld [vmem:[#allocation5 + $0x830] sm:$0xff]
    %v321 = vld [vmem:[#allocation5 + $0x838] sm:$0xff]
    %v322 = vld [vmem:[#allocation5 + $0x840] sm:$0xff]
    %v323 = vld [vmem:[#allocation5 + $0x848] sm:$0xff]
    %v324 = vld [vmem:[#allocation5 + $0x850] sm:$0xff]
    %v325 = vld [vmem:[#allocation5 + $0x858] sm:$0xff]
    %v326 = vld [vmem:[#allocation5 + $0x860] sm:$0xff]
    %v327 = vld [vmem:[#allocation5 + $0x868] sm:$0xff]
    %v328 = vld [vmem:[#allocation5 + $0x870] sm:$0xff]
    %v329 = vld [vmem:[#allocation5 + $0x878] sm:$0xff]
    %v330 = vld [vmem:[#allocation5 + $0x880] sm:$0xff]
    %v331 = vld [vmem:[#allocation5 + $0x888] sm:$0xff]
    %v332 = vld [vmem:[#allocation5 + $0x890] sm:$0xff]
    %v333 = vld [vmem:[#allocation5 + $0x898] sm:$0xff]
    %v334 = vld [vmem:[#allocation5 + $0x8a0] sm:$0xff]
    %v335 = vld [vmem:[#allocation5 + $0x8a8] sm:$0xff]
    %v336 = vld [vmem:[#allocation5 + $0x8b0] sm:$0xff]
    %v337 = vld [vmem:[#allocation5 + $0x8b8] sm:$0xff]
    %v338 = vld [vmem:[#allocation5 + $0x8c0] sm:$0xff]
    %v339 = vld [vmem:[#allocation5 + $0x8c8] sm:$0xff]
    %v340 = vld [vmem:[#allocation5 + $0x8d0] sm:$0xff]
    %v341 = vld [vmem:[#allocation5 + $0x8d8] sm:$0xff]
    %v342 = vld [vmem:[#allocation5 + $0x8e0] sm:$0xff]
    %v343 = vld [vmem:[#allocation5 + $0x8e8] sm:$0xff]
    %v344 = vld [vmem:[#allocation5 + $0x8f0] sm:$0xff]
    %v345 = vld [vmem:[#allocation5 + $0x8f8] sm:$0xff]
    %v346 = vld [vmem:[#allocation5 + $0x900] sm:$0xff]
    %v347 = vld [vmem:[#allocation5 + $0x908] sm:$0xff]
    %v348 = vld [vmem:[#allocation5 + $0x910] sm:$0xff]
    %v349 = vld [vmem:[#allocation5 + $0x918] sm:$0xff]
    %v350 = vld [vmem:[#allocation5 + $0x920] sm:$0xff]
    %v351 = vld [vmem:[#allocation5 + $0x928] sm:$0xff]
    %v352 = vld [vmem:[#allocation5 + $0x930] sm:$0xff]
    %v353 = vld [vmem:[#allocation5 + $0x938] sm:$0xff]
    %v354 = vld [vmem:[#allocation5 + $0x940] sm:$0xff]
    %v355 = vld [vmem:[#allocation5 + $0x948] sm:$0xff]
    %v356 = vld [vmem:[#allocation5 + $0x950] sm:$0xff]
    %v357 = vld [vmem:[#allocation5 + $0x958] sm:$0xff]
    %v358 = vld [vmem:[#allocation5 + $0x960] sm:$0xff]
    %v359 = vld [vmem:[#allocation5 + $0x968] sm:$0xff]
    %v360 = vld [vmem:[#allocation5 + $0x970] sm:$0xff]
    %v361 = vld [vmem:[#allocation5 + $0x978] sm:$0xff]
    %v362 = vld [vmem:[#allocation5 + $0x980] sm:$0xff]
    %v363 = vld [vmem:[#allocation5 + $0x988] sm:$0xff]
    %v364 = vld [vmem:[#allocation5 + $0x990] sm:$0xff]
    %v365 = vld [vmem:[#allocation5 + $0x998] sm:$0xff]
    %v366 = vld [vmem:[#allocation5 + $0x9a0] sm:$0xff]
    %v367 = vld [vmem:[#allocation5 + $0x9a8] sm:$0xff]
    %v368 = vld [vmem:[#allocation5 + $0x9b0] sm:$0xff]
    %v369 = vld [vmem:[#allocation5 + $0x9b8] sm:$0xff]
    %v370 = vld [vmem:[#allocation5 + $0x9c0] sm:$0xff]
    %v371 = vld [vmem:[#allocation5 + $0x9c8] sm:$0xff]
    %v372 = vld [vmem:[#allocation5 + $0x9d0] sm:$0xff]
    %v373 = vld [vmem:[#allocation5 + $0x9d8] sm:$0xff]
    %v374 = vld [vmem:[#allocation5 + $0x9e0] sm:$0xff]
    %v375 = vld [vmem:[#allocation5 + $0x9e8] sm:$0xff]
    %v376 = vld [vmem:[#allocation5 + $0x9f0] sm:$0xff]
    %v377 = vld [vmem:[#allocation5 + $0x9f8] sm:$0xff]
    %v378 = vld [vmem:[#allocation5 + $0xa00] sm:$0xff]
    %v379 = vld [vmem:[#allocation5 + $0xa08] sm:$0xff]
    %v380 = vld [vmem:[#allocation5 + $0xa10] sm:$0xff]
    %v381 = vld [vmem:[#allocation5 + $0xa18] sm:$0xff]
    %v382 = vld [vmem:[#allocation5 + $0xa20] sm:$0xff]
    %v383 = vld [vmem:[#allocation5 + $0xa28] sm:$0xff]
    %v384 = vld [vmem:[#allocation5 + $0xa30] sm:$0xff]
    %v385 = vld [vmem:[#allocation5 + $0xa38] sm:$0xff]
    %v386 = vld [vmem:[#allocation5 + $0xa40] sm:$0xff]
    %v387 = vld [vmem:[#allocation5 + $0xa48] sm:$0xff]
    %v388 = vld [vmem:[#allocation5 + $0xa50] sm:$0xff]
    %v389 = vld [vmem:[#allocation5 + $0xa58] sm:$0xff]
    %v390 = vld [vmem:[#allocation5 + $0xa60] sm:$0xff]
    %v391 = vld [vmem:[#allocation5 + $0xa68] sm:$0xff]
    %v392 = vld [vmem:[#allocation5 + $0xa70] sm:$0xff]
    %v393 = vld [vmem:[#allocation5 + $0xa78] sm:$0xff]
    %v394 = vld [vmem:[#allocation5 + $0xa80] sm:$0xff]
    %v395 = vld [vmem:[#allocation5 + $0xa88] sm:$0xff]
    %v396 = vld [vmem:[#allocation5 + $0xa90] sm:$0xff]
    %v397 = vld [vmem:[#allocation5 + $0xa98] sm:$0xff]
    %v398 = vld [vmem:[#allocation5 + $0xaa0] sm:$0xff]
    %v399 = vld [vmem:[#allocation5 + $0xaa8] sm:$0xff]
    %v400 = vld [vmem:[#allocation5 + $0xab0] sm:$0xff]
    %v401 = vld [vmem:[#allocation5 + $0xab8] sm:$0xff]
    %v402 = vld [vmem:[#allocation5 + $0xac0] sm:$0xff]
    %v403 = vld [vmem:[#allocation5 + $0xac8] sm:$0xff]
    %v404 = vld [vmem:[#allocation5 + $0xad0] sm:$0xff]
    %v405 = vld [vmem:[#allocation5 + $0xad8] sm:$0xff]
    %v406 = vld [vmem:[#allocation5 + $0xae0] sm:$0xff]
    %v407 = vld [vmem:[#allocation5 + $0xae8] sm:$0xff]
    %v408 = vld [vmem:[#allocation5 + $0xaf0] sm:$0xff]
    %v409 = vld [vmem:[#allocation5 + $0xaf8] sm:$0xff]
    %v410 = vld [vmem:[#allocation5 + $0xb00] sm:$0xff]
    %v411 = vld [vmem:[#allocation5 + $0xb08] sm:$0xff]
    %v412 = vld [vmem:[#allocation5 + $0xb10] sm:$0xff]
    %v413 = vld [vmem:[#allocation5 + $0xb18] sm:$0xff]
    %v414 = vld [vmem:[#allocation5 + $0xb20] sm:$0xff]
    %v415 = vld [vmem:[#allocation5 + $0xb28] sm:$0xff]
    %v416 = vld [vmem:[#allocation5 + $0xb30] sm:$0xff]
    %v417 = vld [vmem:[#allocation5 + $0xb38] sm:$0xff]
    %v418 = vld [vmem:[#allocation5 + $0xb40] sm:$0xff]
    %v419 = vld [vmem:[#allocation5 + $0xb48] sm:$0xff]
    %v420 = vld [vmem:[#allocation5 + $0xb50] sm:$0xff]
    %v421 = vld [vmem:[#allocation5 + $0xb58] sm:$0xff]
    %v422 = vld [vmem:[#allocation5 + $0xb60] sm:$0xf]
    %v423 = vld [vmem:[#allocation7] sm:$0x1]
    %v425 = vlaneseq
    %v426 = vshrl.u32 %v425, 7
    %v427 = vsub.s32 0, %v426
    %v428 = vrot.slane %v423, %v427
    %v436 = vcombine.high %v52, %v52
    %v438 = vunpack.c.l.s4 1983009808
    %v439 = vunpack.c.0.s8 %v438
    %v440 = vlaneseq
    %v441 = vshrl.u32 %v440, 7
    %v442 = vsub.s32 %v439, %v441
    %v443 = vrot.slane %v52, %v442
    %v445 = vunpack.c.l.s4 1983009808
    %v446 = vunpack.c.0.s8 %v445
    %v447 = vlaneseq
    %v448 = vshrl.u32 %v447, 7
    %v449 = vsub.s32 %v446, %v448
    %v450 = vrot.slane %v436, %v449
    %v451 = vcombine.high %v443, %v443
    %v452 = vcombine.high %v450, %v450
    %v453 = vcombine.high %v53, %v53
    %v455 = vunpack.c.l.s4 1983009808
    %v456 = vunpack.c.0.s8 %v455
    %v457 = vlaneseq
    %v458 = vshrl.u32 %v457, 7
    %v459 = vsub.s32 %v456, %v458
    %v460 = vrot.slane %v53, %v459
    %v462 = vunpack.c.l.s4 1983009808
    %v463 = vunpack.c.0.s8 %v462
    %v464 = vlaneseq
    %v465 = vshrl.u32 %v464, 7
    %v466 = vsub.s32 %v463, %v465
    %v467 = vrot.slane %v453, %v466
    %v468 = vcombine.high %v460, %v460
    %v469 = vcombine.high %v467, %v467
    %v470 = vcombine.high %v54, %v54
    %v472 = vunpack.c.l.s4 1983009808
    %v473 = vunpack.c.0.s8 %v472
    %v474 = vlaneseq
    %v475 = vshrl.u32 %v474, 7
    %v476 = vsub.s32 %v473, %v475
    %v477 = vrot.slane %v54, %v476
    %v479 = vunpack.c.l.s4 1983009808
    %v480 = vunpack.c.0.s8 %v479
    %v481 = vlaneseq
    %v482 = vshrl.u32 %v481, 7
    %v483 = vsub.s32 %v480, %v482
    %v484 = vrot.slane %v470, %v483
    %v485 = vcombine.high %v477, %v477
    %v486 = vcombine.high %v484, %v484
    %v487 = vcombine.high %v55, %v55
    %v489 = vunpack.c.l.s4 1983009808
    %v490 = vunpack.c.0.s8 %v489
    %v491 = vlaneseq
    %v492 = vshrl.u32 %v491, 7
    %v493 = vsub.s32 %v490, %v492
    %v494 = vrot.slane %v55, %v493
    %v496 = vunpack.c.l.s4 1983009808
    %v497 = vunpack.c.0.s8 %v496
    %v498 = vlaneseq
    %v499 = vshrl.u32 %v498, 7
    %v500 = vsub.s32 %v497, %v499
    %v501 = vrot.slane %v487, %v500
    %v502 = vcombine.high %v494, %v494
    %v503 = vcombine.high %v501, %v501
    %v504 = vcombine.high %v56, %v56
    %v506 = vunpack.c.l.s4 1983009808
    %v507 = vunpack.c.0.s8 %v506
    %v508 = vlaneseq
    %v509 = vshrl.u32 %v508, 7
    %v510 = vsub.s32 %v507, %v509
    %v511 = vrot.slane %v56, %v510
    %v513 = vunpack.c.l.s4 1983009808
    %v514 = vunpack.c.0.s8 %v513
    %v515 = vlaneseq
    %v516 = vshrl.u32 %v515, 7
    %v517 = vsub.s32 %v514, %v516
    %v518 = vrot.slane %v504, %v517
    %v519 = vcombine.high %v511, %v511
    %v520 = vcombine.high %v518, %v518
    %v521 = vcombine.high %v57, %v57
    %v523 = vunpack.c.l.s4 1983009808
    %v524 = vunpack.c.0.s8 %v523
    %v525 = vlaneseq
    %v526 = vshrl.u32 %v525, 7
    %v527 = vsub.s32 %v524, %v526
    %v528 = vrot.slane %v57, %v527
    %v530 = vunpack.c.l.s4 1983009808
    %v531 = vunpack.c.0.s8 %v530
    %v532 = vlaneseq
    %v533 = vshrl.u32 %v532, 7
    %v534 = vsub.s32 %v531, %v533
    %v535 = vrot.slane %v521, %v534
    %v536 = vcombine.high %v528, %v528
    %vm559 = vcmask 818176
    %v560 = vsel %vm559, %v535, 0
    %vm562 = vcmask 1043456
    %v564 = vsel %vm562, %v422, 0
    %566 = vmatprep.subr.mxu0 0.0
    %567 = vmatpush1.msra.mxu0 %v58
    %568 = vmatprep.subr.mxu0 0.0
    %569 = vmatpush1.msra.mxu0 %v59
    %570 = vmatprep.subr.mxu0 0.0
    %571 = vmatpush1.msra.mxu0 %v60
    %572 = vmatprep.subr.mxu0 0.0
    %573 = vmatpush1.msra.mxu0 %v61
    %574 = vmatprep.subr.mxu0 0.0
    %575 = vmatpush1.msra.mxu0 %v62
    %576 = vmatprep.subr.mxu0 0.0
    %577 = vmatpush1.msra.mxu0 %v63
    %578 = vmatprep.subr.mxu0 0.0
    %579 = vmatpush1.msra.mxu0 %v64
    %580 = vmatprep.subr.mxu0 0.0
    %581 = vmatpush1.msra.mxu0 %v65
    %582 = vmatprep.subr.mxu0 0.0
    %583 = vmatpush1.msra.mxu0 %v66
    %584 = vmatprep.subr.mxu0 0.0
    %585 = vmatpush1.msra.mxu0 %v67
    %586 = vmatprep.subr.mxu0 0.0
    %587 = vmatpush1.msra.mxu0 %v68
    %588 = vmatprep.subr.mxu0 0.0
    %589 = vmatpush1.msra.mxu0 %v69
    %590 = vmatprep.subr.mxu0 0.0
    %591 = vmatpush1.msra.mxu0 %v70
    %592 = vmatprep.subr.mxu0 0.0
    %593 = vmatpush1.msra.mxu0 %v71
    %594 = vmatprep.subr.mxu0 0.0
    %595 = vmatpush1.msra.mxu0 %v72
    %596 = vmatprep.subr.mxu0 0.0
    %597 = vmatpush1.msra.mxu0 %v73
    %598 = vmatprep.subr.mxu0 0.0
    %599 = vmatpush1.msra.mxu0 %v74
    %600 = vmatprep.subr.mxu0 0.0
    %601 = vmatpush1.msra.mxu0 %v75
    %602 = vmatprep.subr.mxu0 0.0
    %603 = vmatpush1.msra.mxu0 %v76
    %604 = vmatprep.subr.mxu0 0.0
    %605 = vmatpush1.msra.mxu0 %v77
    %606 = vmatprep.subr.mxu0 0.0
    %607 = vmatpush1.msra.mxu0 %v78
    %608 = vmatprep.subr.mxu0 0.0
    %609 = vmatpush1.msra.mxu0 %v79
    %610 = vmatprep.subr.mxu0 0.0
    %611 = vmatpush1.msra.mxu0 %v80
    %612 = vmatprep.subr.mxu0 0.0
    %613 = vmatpush1.msra.mxu0 %v81
    %614 = vmatprep.subr.mxu0 0.0
    %615 = vmatpush1.msra.mxu0 %v82
    %616 = vmatprep.subr.mxu0 0.0
    %617 = vmatpush1.msra.mxu0 %v83
    %618 = vmatprep.subr.mxu0 0.0
    %619 = vmatpush1.msra.mxu0 %v84
    %620 = vmatprep.subr.mxu0 0.0
    %621 = vmatpush1.msra.mxu0 %v85
    %622 = vmatprep.subr.mxu0 0.0
    %623 = vmatpush1.msra.mxu0 %v86
    %624 = vmatprep.subr.mxu0 0.0
    %625 = vmatpush1.msra.mxu0 %v87
    %626 = vmatprep.subr.mxu0 0.0
    %627 = vmatpush1.msra.mxu0 %v88
    %628 = vmatprep.subr.mxu0 0.0
    %629 = vmatpush1.msra.mxu0 %v89
    %630 = vmatprep.mubr.f32.mxu0 %v451
    %631 = vmatmul.mubr.f32.gmra.mrb[0].mxu0 %v443
    %v632 = vpop.f32.mrb[0].mxu0
    %v633 = vadd.f32 %v428, %v632
    %v634 = vpop.f32.mrb[0].mxu0
    %635 = vdwg.mxu0
    %636 = vmatprep.subr.mxu0 0.0
    %637 = vmatpush1.msra.mxu0 %v90
    %638 = vmatprep.subr.mxu0 0.0
    %639 = vmatpush1.msra.mxu0 %v91
    %640 = vmatprep.subr.mxu0 0.0
    %641 = vmatpush1.msra.mxu0 %v92
    %642 = vmatprep.subr.mxu0 0.0
    %643 = vmatpush1.msra.mxu0 %v93
    %644 = vmatprep.subr.mxu0 0.0
    %645 = vmatpush1.msra.mxu0 %v94
    %646 = vmatprep.subr.mxu0 0.0
    %647 = vmatpush1.msra.mxu0 %v95
    %648 = vmatprep.subr.mxu0 0.0
    %649 = vmatpush1.msra.mxu0 %v96
    %650 = vmatprep.subr.mxu0 0.0
    %651 = vmatpush1.msra.mxu0 %v97
    %652 = vmatprep.subr.mxu0 0.0
    %653 = vmatpush1.msra.mxu0 %v98
    %654 = vmatprep.subr.mxu0 0.0
    %655 = vmatpush1.msra.mxu0 %v99
    %656 = vmatprep.subr.mxu0 0.0
    %657 = vmatpush1.msra.mxu0 %v100
    %658 = vmatprep.subr.mxu0 0.0
    %659 = vmatpush1.msra.mxu0 %v101
    %660 = vmatprep.subr.mxu0 0.0
    %661 = vmatpush1.msra.mxu0 %v102
    %662 = vmatprep.subr.mxu0 0.0
    %663 = vmatpush1.msra.mxu0 %v103
    %664 = vmatprep.subr.mxu0 0.0
    %665 = vmatpush1.msra.mxu0 %v104
    %666 = vmatprep.subr.mxu0 0.0
    %667 = vmatpush1.msra.mxu0 %v105
    %668 = vmatprep.subr.mxu0 0.0
    %669 = vmatpush1.msra.mxu0 %v106
    %670 = vmatprep.subr.mxu0 0.0
    %671 = vmatpush1.msra.mxu0 %v107
    %672 = vmatprep.subr.mxu0 0.0
    %673 = vmatpush1.msra.mxu0 %v108
    %674 = vmatprep.subr.mxu0 0.0
    %675 = vmatpush1.msra.mxu0 %v109
    %676 = vmatprep.subr.mxu0 0.0
    %677 = vmatpush1.msra.mxu0 %v110
    %678 = vmatprep.subr.mxu0 0.0
    %679 = vmatpush1.msra.mxu0 %v111
    %680 = vmatprep.subr.mxu0 0.0
    %681 = vmatpush1.msra.mxu0 %v112
    %682 = vmatprep.subr.mxu0 0.0
    %683 = vmatpush1.msra.mxu0 %v113
    %684 = vmatprep.subr.mxu0 0.0
    %685 = vmatpush1.msra.mxu0 %v114
    %686 = vmatprep.subr.mxu0 0.0
    %687 = vmatpush1.msra.mxu0 %v115
    %688 = vmatprep.subr.mxu0 0.0
    %689 = vmatpush1.msra.mxu0 %v116
    %690 = vmatprep.subr.mxu0 0.0
    %691 = vmatpush1.msra.mxu0 %v117
    %692 = vmatprep.subr.mxu0 0.0
    %693 = vmatpush1.msra.mxu0 %v118
    %694 = vmatprep.subr.mxu0 0.0
    %695 = vmatpush1.msra.mxu0 %v119
    %696 = vmatprep.subr.mxu0 0.0
    %697 = vmatpush1.msra.mxu0 %v120
    %698 = vmatprep.subr.mxu0 0.0
    %699 = vmatpush1.msra.mxu0 %v121
    %700 = vmatprep.mubr.f32.mxu0 %v452
    %701 = vmatmul.mubr.f32.gmra.mrb[0].mxu0 %v450
    %v702 = vpop.f32.mrb[0].mxu0
    %v703 = vadd.f32 %v633, %v702
    %v704 = vpop.f32.mrb[0].mxu0
    %705 = vdwg.mxu0
    %706 = vmatprep.subr.mxu0 0.0
    %707 = vmatpush1.msra.mxu0 %v122
    %708 = vmatprep.subr.mxu0 0.0
    %709 = vmatpush1.msra.mxu0 %v123
    %710 = vmatprep.subr.mxu0 0.0
    %711 = vmatpush1.msra.mxu0 %v124
    %712 = vmatprep.subr.mxu0 0.0
    %713 = vmatpush1.msra.mxu0 %v125
    %714 = vmatprep.subr.mxu0 0.0
    %715 = vmatpush1.msra.mxu0 %v126
    %716 = vmatprep.subr.mxu0 0.0
    %717 = vmatpush1.msra.mxu0 %v127
    %718 = vmatprep.subr.mxu0 0.0
    %719 = vmatpush1.msra.mxu0 %v128
    %720 = vmatprep.subr.mxu0 0.0
    %721 = vmatpush1.msra.mxu0 %v129
    %722 = vmatprep.subr.mxu0 0.0
    %723 = vmatpush1.msra.mxu0 %v130
    %724 = vmatprep.subr.mxu0 0.0
    %725 = vmatpush1.msra.mxu0 %v131
    %726 = vmatprep.subr.mxu0 0.0
    %727 = vmatpush1.msra.mxu0 %v132
    %728 = vmatprep.subr.mxu0 0.0
    %729 = vmatpush1.msra.mxu0 %v133
    %730 = vmatprep.subr.mxu0 0.0
    %731 = vmatpush1.msra.mxu0 %v134
    %732 = vmatprep.subr.mxu0 0.0
    %733 = vmatpush1.msra.mxu0 %v135
    %734 = vmatprep.subr.mxu0 0.0
    %735 = vmatpush1.msra.mxu0 %v136
    %736 = vmatprep.subr.mxu0 0.0
    %737 = vmatpush1.msra.mxu0 %v137
    %738 = vmatprep.subr.mxu0 0.0
    %739 = vmatpush1.msra.mxu0 %v138
    %740 = vmatprep.subr.mxu0 0.0
    %741 = vmatpush1.msra.mxu0 %v139
    %742 = vmatprep.subr.mxu0 0.0
    %743 = vmatpush1.msra.mxu0 %v140
    %744 = vmatprep.subr.mxu0 0.0
    %745 = vmatpush1.msra.mxu0 %v141
    %746 = vmatprep.subr.mxu0 0.0
    %747 = vmatpush1.msra.mxu0 %v142
    %748 = vmatprep.subr.mxu0 0.0
    %749 = vmatpush1.msra.mxu0 %v143
    %750 = vmatprep.subr.mxu0 0.0
    %751 = vmatpush1.msra.mxu0 %v144
    %752 = vmatprep.subr.mxu0 0.0
    %753 = vmatpush1.msra.mxu0 %v145
    %754 = vmatprep.subr.mxu0 0.0
    %755 = vmatpush1.msra.mxu0 %v146
    %756 = vmatprep.subr.mxu0 0.0
    %757 = vmatpush1.msra.mxu0 %v147
    %758 = vmatprep.subr.mxu0 0.0
    %759 = vmatpush1.msra.mxu0 %v148
    %760 = vmatprep.subr.mxu0 0.0
    %761 = vmatpush1.msra.mxu0 %v149
    %762 = vmatprep.subr.mxu0 0.0
    %763 = vmatpush1.msra.mxu0 %v150
    %764 = vmatprep.subr.mxu0 0.0
    %765 = vmatpush1.msra.mxu0 %v151
    %766 = vmatprep.subr.mxu0 0.0
    %767 = vmatpush1.msra.mxu0 %v152
    %768 = vmatprep.subr.mxu0 0.0
    %769 = vmatpush1.msra.mxu0 %v153
    %770 = vmatprep.mubr.f32.mxu0 %v468
    %771 = vmatmul.mubr.f32.gmra.mrb[0].mxu0 %v460
    %v772 = vpop.f32.mrb[0].mxu0
    %v773 = vadd.f32 %v703, %v772
    %v774 = vpop.f32.mrb[0].mxu0
    %775 = vdwg.mxu0
    %776 = vmatprep.subr.mxu0 0.0
    %777 = vmatpush1.msra.mxu0 %v154
    %778 = vmatprep.subr.mxu0 0.0
    %779 = vmatpush1.msra.mxu0 %v155
    %780 = vmatprep.subr.mxu0 0.0
    %781 = vmatpush1.msra.mxu0 %v156
    %782 = vmatprep.subr.mxu0 0.0
    %783 = vmatpush1.msra.mxu0 %v157
    %784 = vmatprep.subr.mxu0 0.0
    %785 = vmatpush1.msra.mxu0 %v158
    %786 = vmatprep.subr.mxu0 0.0
    %787 = vmatpush1.msra.mxu0 %v159
    %788 = vmatprep.subr.mxu0 0.0
    %789 = vmatpush1.msra.mxu0 %v160
    %790 = vmatprep.subr.mxu0 0.0
    %791 = vmatpush1.msra.mxu0 %v161
    %792 = vmatprep.subr.mxu0 0.0
    %793 = vmatpush1.msra.mxu0 %v162
    %794 = vmatprep.subr.mxu0 0.0
    %795 = vmatpush1.msra.mxu0 %v163
    %796 = vmatprep.subr.mxu0 0.0
    %797 = vmatpush1.msra.mxu0 %v164
    %798 = vmatprep.subr.mxu0 0.0
    %799 = vmatpush1.msra.mxu0 %v165
    %800 = vmatprep.subr.mxu0 0.0
    %801 = vmatpush1.msra.mxu0 %v166
    %802 = vmatprep.subr.mxu0 0.0
    %803 = vmatpush1.msra.mxu0 %v167
    %804 = vmatprep.subr.mxu0 0.0
    %805 = vmatpush1.msra.mxu0 %v168
    %806 = vmatprep.subr.mxu0 0.0
    %807 = vmatpush1.msra.mxu0 %v169
    %808 = vmatprep.subr.mxu0 0.0
    %809 = vmatpush1.msra.mxu0 %v170
    %810 = vmatprep.subr.mxu0 0.0
    %811 = vmatpush1.msra.mxu0 %v171
    %812 = vmatprep.subr.mxu0 0.0
    %813 = vmatpush1.msra.mxu0 %v172
    %814 = vmatprep.subr.mxu0 0.0
    %815 = vmatpush1.msra.mxu0 %v173
    %816 = vmatprep.subr.mxu0 0.0
    %817 = vmatpush1.msra.mxu0 %v174
    %818 = vmatprep.subr.mxu0 0.0
    %819 = vmatpush1.msra.mxu0 %v175
    %820 = vmatprep.subr.mxu0 0.0
    %821 = vmatpush1.msra.mxu0 %v176
    %822 = vmatprep.subr.mxu0 0.0
    %823 = vmatpush1.msra.mxu0 %v177
    %824 = vmatprep.subr.mxu0 0.0
    %825 = vmatpush1.msra.mxu0 %v178
    %826 = vmatprep.subr.mxu0 0.0
    %827 = vmatpush1.msra.mxu0 %v179
    %828 = vmatprep.subr.mxu0 0.0
    %829 = vmatpush1.msra.mxu0 %v180
    %830 = vmatprep.subr.mxu0 0.0
    %831 = vmatpush1.msra.mxu0 %v181
    %832 = vmatprep.subr.mxu0 0.0
    %833 = vmatpush1.msra.mxu0 %v182
    %834 = vmatprep.subr.mxu0 0.0
    %835 = vmatpush1.msra.mxu0 %v183
    %836 = vmatprep.subr.mxu0 0.0
    %837 = vmatpush1.msra.mxu0 %v184
    %838 = vmatprep.subr.mxu0 0.0
    %839 = vmatpush1.msra.mxu0 %v185
    %840 = vmatprep.mubr.f32.mxu0 %v469
    %841 = vmatmul.mubr.f32.gmra.mrb[0].mxu0 %v467
    %v842 = vpop.f32.mrb[0].mxu0
    %v843 = vadd.f32 %v773, %v842
    %v844 = vpop.f32.mrb[0].mxu0
    %845 = vdwg.mxu0
    %846 = vmatprep.subr.mxu0 0.0
    %847 = vmatpush1.msra.mxu0 %v186
    %848 = vmatprep.subr.mxu0 0.0
    %849 = vmatpush1.msra.mxu0 %v187
    %850 = vmatprep.subr.mxu0 0.0
    %851 = vmatpush1.msra.mxu0 %v188
    %852 = vmatprep.subr.mxu0 0.0
    %853 = vmatpush1.msra.mxu0 %v189
    %854 = vmatprep.subr.mxu0 0.0
    %855 = vmatpush1.msra.mxu0 %v190
    %856 = vmatprep.subr.mxu0 0.0
    %857 = vmatpush1.msra.mxu0 %v191
    %858 = vmatprep.subr.mxu0 0.0
    %859 = vmatpush1.msra.mxu0 %v192
    %860 = vmatprep.subr.mxu0 0.0
    %861 = vmatpush1.msra.mxu0 %v193
    %862 = vmatprep.subr.mxu0 0.0
    %863 = vmatpush1.msra.mxu0 %v194
    %864 = vmatprep.subr.mxu0 0.0
    %865 = vmatpush1.msra.mxu0 %v195
    %866 = vmatprep.subr.mxu0 0.0
    %867 = vmatpush1.msra.mxu0 %v196
    %868 = vmatprep.subr.mxu0 0.0
    %869 = vmatpush1.msra.mxu0 %v197
    %870 = vmatprep.subr.mxu0 0.0
    %871 = vmatpush1.msra.mxu0 %v198
    %872 = vmatprep.subr.mxu0 0.0
    %873 = vmatpush1.msra.mxu0 %v199
    %874 = vmatprep.subr.mxu0 0.0
    %875 = vmatpush1.msra.mxu0 %v200
    %876 = vmatprep.subr.mxu0 0.0
    %877 = vmatpush1.msra.mxu0 %v201
    %878 = vmatprep.subr.mxu0 0.0
    %879 = vmatpush1.msra.mxu0 %v202
    %880 = vmatprep.subr.mxu0 0.0
    %881 = vmatpush1.msra.mxu0 %v203
    %882 = vmatprep.subr.mxu0 0.0
    %883 = vmatpush1.msra.mxu0 %v204
    %884 = vmatprep.subr.mxu0 0.0
    %885 = vmatpush1.msra.mxu0 %v205
    %886 = vmatprep.subr.mxu0 0.0
    %887 = vmatpush1.msra.mxu0 %v206
    %888 = vmatprep.subr.mxu0 0.0
    %889 = vmatpush1.msra.mxu0 %v207
    %890 = vmatprep.subr.mxu0 0.0
    %891 = vmatpush1.msra.mxu0 %v208
    %892 = vmatprep.subr.mxu0 0.0
    %893 = vmatpush1.msra.mxu0 %v209
    %894 = vmatprep.subr.mxu0 0.0
    %895 = vmatpush1.msra.mxu0 %v210
    %896 = vmatprep.subr.mxu0 0.0
    %897 = vmatpush1.msra.mxu0 %v211
    %898 = vmatprep.subr.mxu0 0.0
    %899 = vmatpush1.msra.mxu0 %v212
    %900 = vmatprep.subr.mxu0 0.0
    %901 = vmatpush1.msra.mxu0 %v213
    %902 = vmatprep.subr.mxu0 0.0
    %903 = vmatpush1.msra.mxu0 %v214
    %904 = vmatprep.subr.mxu0 0.0
    %905 = vmatpush1.msra.mxu0 %v215
    %906 = vmatprep.subr.mxu0 0.0
    %907 = vmatpush1.msra.mxu0 %v216
    %908 = vmatprep.subr.mxu0 0.0
    %909 = vmatpush1.msra.mxu0 %v217
    %910 = vmatprep.mubr.f32.mxu0 %v485
    %911 = vmatmul.mubr.f32.gmra.mrb[0].mxu0 %v477
    %v912 = vpop.f32.mrb[0].mxu0
    %v913 = vadd.f32 %v843, %v912
    %v914 = vpop.f32.mrb[0].mxu0
    %915 = vdwg.mxu0
    %916 = vmatprep.subr.mxu0 0.0
    %917 = vmatpush1.msra.mxu0 %v218
    %918 = vmatprep.subr.mxu0 0.0
    %919 = vmatpush1.msra.mxu0 %v219
    %920 = vmatprep.subr.mxu0 0.0
    %921 = vmatpush1.msra.mxu0 %v220
    %922 = vmatprep.subr.mxu0 0.0
    %923 = vmatpush1.msra.mxu0 %v221
    %924 = vmatprep.subr.mxu0 0.0
    %925 = vmatpush1.msra.mxu0 %v222
    %926 = vmatprep.subr.mxu0 0.0
    %927 = vmatpush1.msra.mxu0 %v223
    %928 = vmatprep.subr.mxu0 0.0
    %929 = vmatpush1.msra.mxu0 %v224
    %930 = vmatprep.subr.mxu0 0.0
    %931 = vmatpush1.msra.mxu0 %v225
    %932 = vmatprep.subr.mxu0 0.0
    %933 = vmatpush1.msra.mxu0 %v226
    %934 = vmatprep.subr.mxu0 0.0
    %935 = vmatpush1.msra.mxu0 %v227
    %936 = vmatprep.subr.mxu0 0.0
    %937 = vmatpush1.msra.mxu0 %v228
    %938 = vmatprep.subr.mxu0 0.0
    %939 = vmatpush1.msra.mxu0 %v229
    %940 = vmatprep.subr.mxu0 0.0
    %941 = vmatpush1.msra.mxu0 %v230
    %942 = vmatprep.subr.mxu0 0.0
    %943 = vmatpush1.msra.mxu0 %v231
    %944 = vmatprep.subr.mxu0 0.0
    %945 = vmatpush1.msra.mxu0 %v232
    %946 = vmatprep.subr.mxu0 0.0
    %947 = vmatpush1.msra.mxu0 %v233
    %948 = vmatprep.subr.mxu0 0.0
    %949 = vmatpush1.msra.mxu0 %v234
    %950 = vmatprep.subr.mxu0 0.0
    %951 = vmatpush1.msra.mxu0 %v235
    %952 = vmatprep.subr.mxu0 0.0
    %953 = vmatpush1.msra.mxu0 %v236
    %954 = vmatprep.subr.mxu0 0.0
    %955 = vmatpush1.msra.mxu0 %v237
    %956 = vmatprep.subr.mxu0 0.0
    %957 = vmatpush1.msra.mxu0 %v238
    %958 = vmatprep.subr.mxu0 0.0
    %959 = vmatpush1.msra.mxu0 %v239
    %960 = vmatprep.subr.mxu0 0.0
    %961 = vmatpush1.msra.mxu0 %v240
    %962 = vmatprep.subr.mxu0 0.0
    %963 = vmatpush1.msra.mxu0 %v241
    %964 = vmatprep.subr.mxu0 0.0
    %965 = vmatpush1.msra.mxu0 %v242
    %966 = vmatprep.subr.mxu0 0.0
    %967 = vmatpush1.msra.mxu0 %v243
    %968 = vmatprep.subr.mxu0 0.0
    %969 = vmatpush1.msra.mxu0 %v244
    %970 = vmatprep.subr.mxu0 0.0
    %971 = vmatpush1.msra.mxu0 %v245
    %972 = vmatprep.subr.mxu0 0.0
    %973 = vmatpush1.msra.mxu0 %v246
    %974 = vmatprep.subr.mxu0 0.0
    %975 = vmatpush1.msra.mxu0 %v247
    %976 = vmatprep.subr.mxu0 0.0
    %977 = vmatpush1.msra.mxu0 %v248
    %978 = vmatprep.subr.mxu0 0.0
    %979 = vmatpush1.msra.mxu0 %v249
    %980 = vmatprep.mubr.f32.mxu0 %v486
    %981 = vmatmul.mubr.f32.gmra.mrb[0].mxu0 %v484
    %v982 = vpop.f32.mrb[0].mxu0
    %v983 = vadd.f32 %v913, %v982
    %v984 = vpop.f32.mrb[0].mxu0
    %985 = vdwg.mxu0
    %986 = vmatprep.subr.mxu0 0.0
    %987 = vmatpush1.msra.mxu0 %v250
    %988 = vmatprep.subr.mxu0 0.0
    %989 = vmatpush1.msra.mxu0 %v251
    %990 = vmatprep.subr.mxu0 0.0
    %991 = vmatpush1.msra.mxu0 %v252
    %992 = vmatprep.subr.mxu0 0.0
    %993 = vmatpush1.msra.mxu0 %v253
    %994 = vmatprep.subr.mxu0 0.0
    %995 = vmatpush1.msra.mxu0 %v254
    %996 = vmatprep.subr.mxu0 0.0
    %997 = vmatpush1.msra.mxu0 %v255
    %998 = vmatprep.subr.mxu0 0.0
    %999 = vmatpush1.msra.mxu0 %v256
    %1000 = vmatprep.subr.mxu0 0.0
    %1001 = vmatpush1.msra.mxu0 %v257
    %1002 = vmatprep.subr.mxu0 0.0
    %1003 = vmatpush1.msra.mxu0 %v258
    %1004 = vmatprep.subr.mxu0 0.0
    %1005 = vmatpush1.msra.mxu0 %v259
    %1006 = vmatprep.subr.mxu0 0.0
    %1007 = vmatpush1.msra.mxu0 %v260
    %1008 = vmatprep.subr.mxu0 0.0
    %1009 = vmatpush1.msra.mxu0 %v261
    %1010 = vmatprep.subr.mxu0 0.0
    %1011 = vmatpush1.msra.mxu0 %v262
    %1012 = vmatprep.subr.mxu0 0.0
    %1013 = vmatpush1.msra.mxu0 %v263
    %1014 = vmatprep.subr.mxu0 0.0
    %1015 = vmatpush1.msra.mxu0 %v264
    %1016 = vmatprep.subr.mxu0 0.0
    %1017 = vmatpush1.msra.mxu0 %v265
    %1018 = vmatprep.subr.mxu0 0.0
    %1019 = vmatpush1.msra.mxu0 %v266
    %1020 = vmatprep.subr.mxu0 0.0
    %1021 = vmatpush1.msra.mxu0 %v267
    %1022 = vmatprep.subr.mxu0 0.0
    %1023 = vmatpush1.msra.mxu0 %v268
    %1024 = vmatprep.subr.mxu0 0.0
    %1025 = vmatpush1.msra.mxu0 %v269
    %1026 = vmatprep.subr.mxu0 0.0
    %1027 = vmatpush1.msra.mxu0 %v270
    %1028 = vmatprep.subr.mxu0 0.0
    %1029 = vmatpush1.msra.mxu0 %v271
    %1030 = vmatprep.subr.mxu0 0.0
    %1031 = vmatpush1.msra.mxu0 %v272
    %1032 = vmatprep.subr.mxu0 0.0
    %1033 = vmatpush1.msra.mxu0 %v273
    %1034 = vmatprep.subr.mxu0 0.0
    %1035 = vmatpush1.msra.mxu0 %v274
    %1036 = vmatprep.subr.mxu0 0.0
    %1037 = vmatpush1.msra.mxu0 %v275
    %1038 = vmatprep.subr.mxu0 0.0
    %1039 = vmatpush1.msra.mxu0 %v276
    %1040 = vmatprep.subr.mxu0 0.0
    %1041 = vmatpush1.msra.mxu0 %v277
    %1042 = vmatprep.subr.mxu0 0.0
    %1043 = vmatpush1.msra.mxu0 %v278
    %1044 = vmatprep.subr.mxu0 0.0
    %1045 = vmatpush1.msra.mxu0 %v279
    %1046 = vmatprep.subr.mxu0 0.0
    %1047 = vmatpush1.msra.mxu0 %v280
    %1048 = vmatprep.subr.mxu0 0.0
    %1049 = vmatpush1.msra.mxu0 %v281
    %1050 = vmatprep.mubr.f32.mxu0 %v502
    %1051 = vmatmul.mubr.f32.gmra.mrb[0].mxu0 %v494
    %v1052 = vpop.f32.mrb[0].mxu0
    %v1053 = vadd.f32 %v983, %v1052
    %v1054 = vpop.f32.mrb[0].mxu0
    %1055 = vdwg.mxu0
    %1056 = vmatprep.subr.mxu0 0.0
    %1057 = vmatpush1.msra.mxu0 %v282
    %1058 = vmatprep.subr.mxu0 0.0
    %1059 = vmatpush1.msra.mxu0 %v283
    %1060 = vmatprep.subr.mxu0 0.0
    %1061 = vmatpush1.msra.mxu0 %v284
    %1062 = vmatprep.subr.mxu0 0.0
    %1063 = vmatpush1.msra.mxu0 %v285
    %1064 = vmatprep.subr.mxu0 0.0
    %1065 = vmatpush1.msra.mxu0 %v286
    %1066 = vmatprep.subr.mxu0 0.0
    %1067 = vmatpush1.msra.mxu0 %v287
    %1068 = vmatprep.subr.mxu0 0.0
    %1069 = vmatpush1.msra.mxu0 %v288
    %1070 = vmatprep.subr.mxu0 0.0
    %1071 = vmatpush1.msra.mxu0 %v289
    %1072 = vmatprep.subr.mxu0 0.0
    %1073 = vmatpush1.msra.mxu0 %v290
    %1074 = vmatprep.subr.mxu0 0.0
    %1075 = vmatpush1.msra.mxu0 %v291
    %1076 = vmatprep.subr.mxu0 0.0
    %1077 = vmatpush1.msra.mxu0 %v292
    %1078 = vmatprep.subr.mxu0 0.0
    %1079 = vmatpush1.msra.mxu0 %v293
    %1080 = vmatprep.subr.mxu0 0.0
    %1081 = vmatpush1.msra.mxu0 %v294
    %1082 = vmatprep.subr.mxu0 0.0
    %1083 = vmatpush1.msra.mxu0 %v295
    %1084 = vmatprep.subr.mxu0 0.0
    %1085 = vmatpush1.msra.mxu0 %v296
    %1086 = vmatprep.subr.mxu0 0.0
    %1087 = vmatpush1.msra.mxu0 %v297
    %1088 = vmatprep.subr.mxu0 0.0
    %1089 = vmatpush1.msra.mxu0 %v298
    %1090 = vmatprep.subr.mxu0 0.0
    %1091 = vmatpush1.msra.mxu0 %v299
    %1092 = vmatprep.subr.mxu0 0.0
    %1093 = vmatpush1.msra.mxu0 %v300
    %1094 = vmatprep.subr.mxu0 0.0
    %1095 = vmatpush1.msra.mxu0 %v301
    %1096 = vmatprep.subr.mxu0 0.0
    %1097 = vmatpush1.msra.mxu0 %v302
    %1098 = vmatprep.subr.mxu0 0.0
    %1099 = vmatpush1.msra.mxu0 %v303
    %1100 = vmatprep.subr.mxu0 0.0
    %1101 = vmatpush1.msra.mxu0 %v304
    %1102 = vmatprep.subr.mxu0 0.0
    %1103 = vmatpush1.msra.mxu0 %v305
    %1104 = vmatprep.subr.mxu0 0.0
    %1105 = vmatpush1.msra.mxu0 %v306
    %1106 = vmatprep.subr.mxu0 0.0
    %1107 = vmatpush1.msra.mxu0 %v307
    %1108 = vmatprep.subr.mxu0 0.0
    %1109 = vmatpush1.msra.mxu0 %v308
    %1110 = vmatprep.subr.mxu0 0.0
    %1111 = vmatpush1.msra.mxu0 %v309
    %1112 = vmatprep.subr.mxu0 0.0
    %1113 = vmatpush1.msra.mxu0 %v310
    %1114 = vmatprep.subr.mxu0 0.0
    %1115 = vmatpush1.msra.mxu0 %v311
    %1116 = vmatprep.subr.mxu0 0.0
    %1117 = vmatpush1.msra.mxu0 %v312
    %1118 = vmatprep.subr.mxu0 0.0
    %1119 = vmatpush1.msra.mxu0 %v313
    %1120 = vmatprep.mubr.f32.mxu0 %v503
    %1121 = vmatmul.mubr.f32.gmra.mrb[0].mxu0 %v501
    %v1122 = vpop.f32.mrb[0].mxu0
    %v1123 = vadd.f32 %v1053, %v1122
    %v1124 = vpop.f32.mrb[0].mxu0
    %1125 = vdwg.mxu0
    %1126 = vmatprep.subr.mxu0 0.0
    %1127 = vmatpush1.msra.mxu0 %v314
    %1128 = vmatprep.subr.mxu0 0.0
    %1129 = vmatpush1.msra.mxu0 %v315
    %1130 = vmatprep.subr.mxu0 0.0
    %1131 = vmatpush1.msra.mxu0 %v316
    %1132 = vmatprep.subr.mxu0 0.0
    %1133 = vmatpush1.msra.mxu0 %v317
    %1134 = vmatprep.subr.mxu0 0.0
    %1135 = vmatpush1.msra.mxu0 %v318
    %1136 = vmatprep.subr.mxu0 0.0
    %1137 = vmatpush1.msra.mxu0 %v319
    %1138 = vmatprep.subr.mxu0 0.0
    %1139 = vmatpush1.msra.mxu0 %v320
    %1140 = vmatprep.subr.mxu0 0.0
    %1141 = vmatpush1.msra.mxu0 %v321
    %1142 = vmatprep.subr.mxu0 0.0
    %1143 = vmatpush1.msra.mxu0 %v322
    %1144 = vmatprep.subr.mxu0 0.0
    %1145 = vmatpush1.msra.mxu0 %v323
    %1146 = vmatprep.subr.mxu0 0.0
    %1147 = vmatpush1.msra.mxu0 %v324
    %1148 = vmatprep.subr.mxu0 0.0
    %1149 = vmatpush1.msra.mxu0 %v325
    %1150 = vmatprep.subr.mxu0 0.0
    %1151 = vmatpush1.msra.mxu0 %v326
    %1152 = vmatprep.subr.mxu0 0.0
    %1153 = vmatpush1.msra.mxu0 %v327
    %1154 = vmatprep.subr.mxu0 0.0
    %1155 = vmatpush1.msra.mxu0 %v328
    %1156 = vmatprep.subr.mxu0 0.0
    %1157 = vmatpush1.msra.mxu0 %v329
    %1158 = vmatprep.subr.mxu0 0.0
    %1159 = vmatpush1.msra.mxu0 %v330
    %1160 = vmatprep.subr.mxu0 0.0
    %1161 = vmatpush1.msra.mxu0 %v331
    %1162 = vmatprep.subr.mxu0 0.0
    %1163 = vmatpush1.msra.mxu0 %v332
    %1164 = vmatprep.subr.mxu0 0.0
    %1165 = vmatpush1.msra.mxu0 %v333
    %1166 = vmatprep.subr.mxu0 0.0
    %1167 = vmatpush1.msra.mxu0 %v334
    %1168 = vmatprep.subr.mxu0 0.0
    %1169 = vmatpush1.msra.mxu0 %v335
    %1170 = vmatprep.subr.mxu0 0.0
    %1171 = vmatpush1.msra.mxu0 %v336
    %1172 = vmatprep.subr.mxu0 0.0
    %1173 = vmatpush1.msra.mxu0 %v337
    %1174 = vmatprep.subr.mxu0 0.0
    %1175 = vmatpush1.msra.mxu0 %v338
    %1176 = vmatprep.subr.mxu0 0.0
    %1177 = vmatpush1.msra.mxu0 %v339
    %1178 = vmatprep.subr.mxu0 0.0
    %1179 = vmatpush1.msra.mxu0 %v340
    %1180 = vmatprep.subr.mxu0 0.0
    %1181 = vmatpush1.msra.mxu0 %v341
    %1182 = vmatprep.subr.mxu0 0.0
    %1183 = vmatpush1.msra.mxu0 %v342
    %1184 = vmatprep.subr.mxu0 0.0
    %1185 = vmatpush1.msra.mxu0 %v343
    %1186 = vmatprep.subr.mxu0 0.0
    %1187 = vmatpush1.msra.mxu0 %v344
    %1188 = vmatprep.subr.mxu0 0.0
    %1189 = vmatpush1.msra.mxu0 %v345
    %1190 = vmatprep.mubr.f32.mxu0 %v519
    %1191 = vmatmul.mubr.f32.gmra.mrb[0].mxu0 %v511
    %v1192 = vpop.f32.mrb[0].mxu0
    %v1193 = vadd.f32 %v1123, %v1192
    %v1194 = vpop.f32.mrb[0].mxu0
    %1195 = vdwg.mxu0
    %1196 = vmatprep.subr.mxu0 0.0
    %1197 = vmatpush1.msra.mxu0 %v346
    %1198 = vmatprep.subr.mxu0 0.0
    %1199 = vmatpush1.msra.mxu0 %v347
    %1200 = vmatprep.subr.mxu0 0.0
    %1201 = vmatpush1.msra.mxu0 %v348
    %1202 = vmatprep.subr.mxu0 0.0
    %1203 = vmatpush1.msra.mxu0 %v349
    %1204 = vmatprep.subr.mxu0 0.0
    %1205 = vmatpush1.msra.mxu0 %v350
    %1206 = vmatprep.subr.mxu0 0.0
    %1207 = vmatpush1.msra.mxu0 %v351
    %1208 = vmatprep.subr.mxu0 0.0
    %1209 = vmatpush1.msra.mxu0 %v352
    %1210 = vmatprep.subr.mxu0 0.0
    %1211 = vmatpush1.msra.mxu0 %v353
    %1212 = vmatprep.subr.mxu0 0.0
    %1213 = vmatpush1.msra.mxu0 %v354
    %1214 = vmatprep.subr.mxu0 0.0
    %1215 = vmatpush1.msra.mxu0 %v355
    %1216 = vmatprep.subr.mxu0 0.0
    %1217 = vmatpush1.msra.mxu0 %v356
    %1218 = vmatprep.subr.mxu0 0.0
    %1219 = vmatpush1.msra.mxu0 %v357
    %1220 = vmatprep.subr.mxu0 0.0
    %1221 = vmatpush1.msra.mxu0 %v358
    %1222 = vmatprep.subr.mxu0 0.0
    %1223 = vmatpush1.msra.mxu0 %v359
    %1224 = vmatprep.subr.mxu0 0.0
    %1225 = vmatpush1.msra.mxu0 %v360
    %1226 = vmatprep.subr.mxu0 0.0
    %1227 = vmatpush1.msra.mxu0 %v361
    %1228 = vmatprep.subr.mxu0 0.0
    %1229 = vmatpush1.msra.mxu0 %v362
    %1230 = vmatprep.subr.mxu0 0.0
    %1231 = vmatpush1.msra.mxu0 %v363
    %1232 = vmatprep.subr.mxu0 0.0
    %1233 = vmatpush1.msra.mxu0 %v364
    %1234 = vmatprep.subr.mxu0 0.0
    %1235 = vmatpush1.msra.mxu0 %v365
    %1236 = vmatprep.subr.mxu0 0.0
    %1237 = vmatpush1.msra.mxu0 %v366
    %1238 = vmatprep.subr.mxu0 0.0
    %1239 = vmatpush1.msra.mxu0 %v367
    %1240 = vmatprep.subr.mxu0 0.0
    %1241 = vmatpush1.msra.mxu0 %v368
    %1242 = vmatprep.subr.mxu0 0.0
    %1243 = vmatpush1.msra.mxu0 %v369
    %1244 = vmatprep.subr.mxu0 0.0
    %1245 = vmatpush1.msra.mxu0 %v370
    %1246 = vmatprep.subr.mxu0 0.0
    %1247 = vmatpush1.msra.mxu0 %v371
    %1248 = vmatprep.subr.mxu0 0.0
    %1249 = vmatpush1.msra.mxu0 %v372
    %1250 = vmatprep.subr.mxu0 0.0
    %1251 = vmatpush1.msra.mxu0 %v373
    %1252 = vmatprep.subr.mxu0 0.0
    %1253 = vmatpush1.msra.mxu0 %v374
    %1254 = vmatprep.subr.mxu0 0.0
    %1255 = vmatpush1.msra.mxu0 %v375
    %1256 = vmatprep.subr.mxu0 0.0
    %1257 = vmatpush1.msra.mxu0 %v376
    %1258 = vmatprep.subr.mxu0 0.0
    %1259 = vmatpush1.msra.mxu0 %v377
    %1260 = vmatprep.mubr.f32.mxu0 %v520
    %1261 = vmatmul.mubr.f32.gmra.mrb[0].mxu0 %v518
    %v1262 = vpop.f32.mrb[0].mxu0
    %v1263 = vadd.f32 %v1193, %v1262
    %v1264 = vpop.f32.mrb[0].mxu0
    %1265 = vdwg.mxu0
    %1266 = vmatprep.subr.mxu0 0.0
    %1267 = vmatpush1.msra.mxu0 %v378
    %1268 = vmatprep.subr.mxu0 0.0
    %1269 = vmatpush1.msra.mxu0 %v379
    %1270 = vmatprep.subr.mxu0 0.0
    %1271 = vmatpush1.msra.mxu0 %v380
    %1272 = vmatprep.subr.mxu0 0.0
    %1273 = vmatpush1.msra.mxu0 %v381
    %1274 = vmatprep.subr.mxu0 0.0
    %1275 = vmatpush1.msra.mxu0 %v382
    %1276 = vmatprep.subr.mxu0 0.0
    %1277 = vmatpush1.msra.mxu0 %v383
    %1278 = vmatprep.subr.mxu0 0.0
    %1279 = vmatpush1.msra.mxu0 %v384
    %1280 = vmatprep.subr.mxu0 0.0
    %1281 = vmatpush1.msra.mxu0 %v385
    %1282 = vmatprep.subr.mxu0 0.0
    %1283 = vmatpush1.msra.mxu0 %v386
    %1284 = vmatprep.subr.mxu0 0.0
    %1285 = vmatpush1.msra.mxu0 %v387
    %1286 = vmatprep.subr.mxu0 0.0
    %1287 = vmatpush1.msra.mxu0 %v388
    %1288 = vmatprep.subr.mxu0 0.0
    %1289 = vmatpush1.msra.mxu0 %v389
    %1290 = vmatprep.subr.mxu0 0.0
    %1291 = vmatpush1.msra.mxu0 %v390
    %1292 = vmatprep.subr.mxu0 0.0
    %1293 = vmatpush1.msra.mxu0 %v391
    %1294 = vmatprep.subr.mxu0 0.0
    %1295 = vmatpush1.msra.mxu0 %v392
    %1296 = vmatprep.subr.mxu0 0.0
    %1297 = vmatpush1.msra.mxu0 %v393
    %1298 = vmatprep.subr.mxu0 0.0
    %1299 = vmatpush1.msra.mxu0 %v394
    %1300 = vmatprep.subr.mxu0 0.0
    %1301 = vmatpush1.msra.mxu0 %v395
    %1302 = vmatprep.subr.mxu0 0.0
    %1303 = vmatpush1.msra.mxu0 %v396
    %1304 = vmatprep.subr.mxu0 0.0
    %1305 = vmatpush1.msra.mxu0 %v397
    %1306 = vmatprep.subr.mxu0 0.0
    %1307 = vmatpush1.msra.mxu0 %v398
    %1308 = vmatprep.subr.mxu0 0.0
    %1309 = vmatpush1.msra.mxu0 %v399
    %1310 = vmatprep.subr.mxu0 0.0
    %1311 = vmatpush1.msra.mxu0 %v400
    %1312 = vmatprep.subr.mxu0 0.0
    %1313 = vmatpush1.msra.mxu0 %v401
    %1314 = vmatprep.subr.mxu0 0.0
    %1315 = vmatpush1.msra.mxu0 %v402
    %1316 = vmatprep.subr.mxu0 0.0
    %1317 = vmatpush1.msra.mxu0 %v403
    %1318 = vmatprep.subr.mxu0 0.0
    %1319 = vmatpush1.msra.mxu0 %v404
    %1320 = vmatprep.subr.mxu0 0.0
    %1321 = vmatpush1.msra.mxu0 %v405
    %1322 = vmatprep.subr.mxu0 0.0
    %1323 = vmatpush1.msra.mxu0 %v406
    %1324 = vmatprep.subr.mxu0 0.0
    %1325 = vmatpush1.msra.mxu0 %v407
    %1326 = vmatprep.subr.mxu0 0.0
    %1327 = vmatpush1.msra.mxu0 %v408
    %1328 = vmatprep.subr.mxu0 0.0
    %1329 = vmatpush1.msra.mxu0 %v409
    %1330 = vmatprep.mubr.f32.mxu0 %v536
    %1331 = vmatmul.mubr.f32.gmra.mrb[0].mxu0 %v528
    %v1332 = vpop.f32.mrb[0].mxu0
    %v1333 = vadd.f32 %v1263, %v1332
    %v1334 = vpop.f32.mrb[0].mxu0
    %1335 = vdwg.mxu0
    %1336 = vmatprep.subr.mxu0 0.0
    %1337 = vmatpush1.msra.mxu0 %v410
    %1338 = vmatprep.subr.mxu0 0.0
    %1339 = vmatpush1.msra.mxu0 %v411
    %1340 = vmatprep.subr.mxu0 0.0
    %1341 = vmatpush1.msra.mxu0 %v412
    %1342 = vmatprep.subr.mxu0 0.0
    %1343 = vmatpush1.msra.mxu0 %v413
    %1344 = vmatprep.subr.mxu0 0.0
    %1345 = vmatpush1.msra.mxu0 %v414
    %1346 = vmatprep.subr.mxu0 0.0
    %1347 = vmatpush1.msra.mxu0 %v415
    %1348 = vmatprep.subr.mxu0 0.0
    %1349 = vmatpush1.msra.mxu0 %v416
    %1350 = vmatprep.subr.mxu0 0.0
    %1351 = vmatpush1.msra.mxu0 %v417
    %1352 = vmatprep.subr.mxu0 0.0
    %1353 = vmatpush1.msra.mxu0 %v418
    %1354 = vmatprep.subr.mxu0 0.0
    %1355 = vmatpush1.msra.mxu0 %v419
    %1356 = vmatprep.subr.mxu0 0.0
    %1357 = vmatpush1.msra.mxu0 %v420
    %1358 = vmatprep.subr.mxu0 0.0
    %1359 = vmatpush1.msra.mxu0 %v421
    %1360 = vmatprep.subr.mxu0 0.0
    %1361 = vmatpush1.msra.mxu0 %v564
    %1362 = vmatprep.subr.mxu0 0.0
    %1363 = vmatpush1.msra.mxu0 0.0
    %1364 = vmatprep.subr.mxu0 0.0
    %1365 = vmatpush1.msra.mxu0 0.0
    %1366 = vmatprep.subr.mxu0 0.0
    %1367 = vmatpush1.msra.mxu0 0.0
    %1368 = vmatprep.subr.mxu0 0.0
    %1369 = vmatpush1.msra.mxu0 0.0
    %1370 = vmatprep.subr.mxu0 0.0
    %1371 = vmatpush1.msra.mxu0 0.0
    %1372 = vmatprep.subr.mxu0 0.0
    %1373 = vmatpush1.msra.mxu0 0.0
    %1374 = vmatprep.subr.mxu0 0.0
    %1375 = vmatpush1.msra.mxu0 0.0
    %1376 = vmatprep.subr.mxu0 0.0
    %1377 = vmatpush1.msra.mxu0 0.0
    %1378 = vmatprep.subr.mxu0 0.0
    %1379 = vmatpush1.msra.mxu0 0.0
    %1380 = vmatprep.subr.mxu0 0.0
    %1381 = vmatpush1.msra.mxu0 0.0
    %1382 = vmatprep.subr.mxu0 0.0
    %1383 = vmatpush1.msra.mxu0 0.0
    %1384 = vmatprep.subr.mxu0 0.0
    %1385 = vmatpush1.msra.mxu0 0.0
    %1386 = vmatprep.subr.mxu0 0.0
    %1387 = vmatpush1.msra.mxu0 0.0
    %1388 = vmatprep.subr.mxu0 0.0
    %1389 = vmatpush1.msra.mxu0 0.0
    %1390 = vmatprep.subr.mxu0 0.0
    %1391 = vmatpush1.msra.mxu0 0.0
    %1392 = vmatprep.subr.mxu0 0.0
    %1393 = vmatpush1.msra.mxu0 0.0
    %1394 = vmatprep.subr.mxu0 0.0
    %1395 = vmatpush1.msra.mxu0 0.0
    %1396 = vmatprep.subr.mxu0 0.0
    %1397 = vmatpush1.msra.mxu0 0.0
    %1398 = vmatprep.subr.mxu0 0.0
    %1399 = vmatpush1.msra.mxu0 0.0
    %1400 = vmatprep.mubr.f32.mxu0 0.0
    %1401 = vmatmul.mubr.f32.gmra.mrb[0].mxu0 %v560
    %v1402 = vpop.f32.mrb[0].mxu0
    %v1403 = vadd.f32 %v1333, %v1402
    %v1404 = vpop.f32.mrb[0].mxu0
    %1405 = vdwg.mxu0
    %1406 = vst [vmem:[#allocation8] sm:$0x3] %v1403
    // Predicated region
    $region26: #{tpu_custom_call.1} parent=1 // pred_check
      _
    $region27: #{tpu_custom_call.1} parent=1 // pred_check_branch
      %1408 = sbr.rel (0) target = $region29
    $region28: #{tpu_custom_call.1} parent=1 // pred_region
      %s1410 = ssub.s32 32, 32
      %1411 = vsyncadd [#allocation4], %s1410
      %s1413 = sshll.u32 [#allocation8], 4
      %s1414 = int_to_ptr.vmem [resolvable:$true] %s1413
      %1416 = dma.vmem_to_hbm [thread:$0]  %s1414, 32, %s3, [#allocation4]
    $region29: #{tpu_custom_call.1} parent=1 // pred_fallthru
      _
    // Predicated region
    $region30: #{tpu_custom_call.1} parent=1 // pred_check
      _
    $region31: #{tpu_custom_call.1} parent=1 // pred_check_branch
      %1418 = sbr.rel (0) target = $region33
    $region32: #{tpu_custom_call.1} parent=1 // pred_region
      %1419 = dma.done [#allocation4], 32
    $region33: #{tpu_custom_call.1} parent=1 // pred_fallthru
      _
    %1420 = vsyncpa [#allocation3], 1
    %1421 = vsyncpa [#allocation6], 1
    %1422 = vsyncpa [#allocation4], 1

</llo_original>
